<compile_context>
chip_gen: v5e
topology: v5e:2x2
jax: 0.10.0
libtpu: 0.0.40
codegen_flags: <defaults>
</compile_context>

<pallas_src>
import functools

import numpy as np
import jax
import jax.numpy as jnp
from jax import lax
from jax.experimental import pallas as pl
from jax.experimental.pallas import tpu as pltpu

# sym4 filters, copied verbatim from the module's __init__ (deterministic).
H0 = np.array(
    [-0.075765714789273, -0.029635527645998, 0.497618667632015,
     0.803738751805216, 0.297857795605542, -0.099219543576847,
     -0.012603967262261, 0.032223100604042], dtype=np.float32)
H1 = np.array(
    [-0.032223100604042, -0.012603967262261, 0.099219543576847,
     0.297857795605542, -0.803738751805216, 0.497618667632015,
     0.029635527645998, -0.075765714789273], dtype=np.float32)

_NTAPS = 8


def _round_up(n, m):
    return ((n + m - 1) // m) * m


def _cdiv(a, b):
    return -(-a // b)


def _for_strips(n_strips, strip, fn):
    """Run fn(row_offset) for every row strip. Static call when trivial."""
    if n_strips == 1:
        fn(0)
    else:
        def body(si, carry):
            fn(pl.multiple_of(si * strip, strip))
            return carry
        lax.fori_loop(0, n_strips, body, 0)


def _modwt_kernel(x_ref, o_ref, app_ref, *, sel_lvls, max_lvl, L, Lp, PL, STRIP):
    """x_ref: (rb, L) f32; o_ref: (rb, num_sel*Lp) f32; app_ref: (rb, Wp) f32.

    PyTorch F.conv1d(padding='same') with the zero-upsampled length-8*uf filter
    pads left = 4*uf - 1 zeros, so (cross-correlation):
        y[n] = sum_j taps[j] * x[n + j*uf - (4*uf - 1)],  x == 0 outside [0, L).
    The current approximation lives at app_ref[:, PL:PL+L] with zeroed pads on
    both sides, so each tap is a static shifted slice of that buffer.
    """
    rb, Wp = app_ref.shape
    n_strips = rb // STRIP

    # --- init: zero pads + copy signal into the (128-aligned) centre --------
    # Strip-blocked so no (rb, L)-sized temporaries are ever live.  Do NOT
    # guard this with program_id == 0: scratch is per-core under megacore and
    # every grid step owns different rows.
    def init_strip(r0):
        rows = pl.ds(r0, STRIP)
        app_ref[rows, :PL] = jnp.zeros((STRIP, PL), jnp.float32)
        app_ref[rows, PL:PL + L] = x_ref[rows, :]
        app_ref[rows, PL + L:] = jnp.zeros((STRIP, Wp - PL - L), jnp.float32)

    _for_strips(n_strips, STRIP, init_strip)

    # --- cascade: fused H1 (detail) / H0 (next approx) per level ------------
    for lvl in range(max_lvl + 1):
        uf = 2 ** lvl
        base = PL - (4 * uf - 1)           # tap j reads app_ref[:, base+j*uf : +L]
        need_detail = lvl in sel_lvls      # high-pass output kept at this level?
        need_approx = lvl < max_lvl        # low-pass feeds the next level?
        slots = [s for s, sl in enumerate(sel_lvls) if sl == lvl]

        def level_strip(r0, base=base, uf=uf, need_detail=need_detail,
                        need_approx=need_approx, slots=slots):
            rows = pl.ds(r0, STRIP)
            # Tap 0 initializes the accumulators (no zeros materialization);
            # one shifted read per tap feeds both accumulators.
            v = app_ref[rows, base:base + L]
            det = float(H1[0]) * v if need_detail else None
            app = float(H0[0]) * v if need_approx else None
            for j in range(1, _NTAPS):
                s = base + j * uf          # static; 0 <= s and s + L <= Wp
                v = app_ref[rows, s:s + L]
                if need_detail:
                    det = det + float(H1[j]) * v
                if need_approx:
                    app = app + float(H0[j]) * v
            if need_detail:
                for slot in slots:         # slot starts are 128-aligned (Lp)
                    o_ref[rows, slot * Lp:slot * Lp + L] = det
            if need_approx:                # 128-aligned writeback (PL % 128 == 0)
                app_ref[rows, PL:PL + L] = app

        _for_strips(n_strips, STRIP, level_strip)


def modwt_forward(signal, selected_levels=(3, 4), row_block=1024,
                  vmem_budget_bytes=24 * 1024 * 1024):
    """signal: (B, C, L) -> (B, C, len(selected_levels), L) float32."""
    B, C, L = signal.shape
    sel_lvls = tuple(i - 1 for i in selected_levels)   # 1-indexed -> conv-level index
    assert all(s >= 0 for s in sel_lvls)
    num_sel = len(sel_lvls)
    max_lvl = max(sel_lvls)

    uf_max = 2 ** max_lvl
    PL = _round_up(4 * uf_max - 1, 128)    # aligned left pad (>= max left tap reach)
    PR = 3 * uf_max + 1                    # max right tap reach
    Lp = _round_up(L, 128)                 # aligned per-slot output width
    Wp = _round_up(PL + L + PR, 128)       # scratch width, lane-tile aligned

    # Row strip for register blocking: ~3 live (STRIP, Lp) f32 values
    # (det, app, tap slice) must fit comfortably in the 64-vreg file.
    STRIP = max(8, min(32, (12288 // max(Lp, 128)) // 8 * 8))

    R = B * C
    x = signal.reshape(R, L).astype(jnp.float32)

    # VMEM per grid step: double-buffered input + output, single scratch.
    per_row_bytes = 4 * (2 * L + 2 * num_sel * Lp + Wp)
    rb_cap = max(STRIP, (vmem_budget_bytes // per_row_bytes) // STRIP * STRIP)

    Rs = _round_up(R, STRIP)
    rb = max(STRIP, (min(row_block, rb_cap, Rs) // STRIP) * STRIP)
    # Prefer >= 2 grid steps along the parallel (row) axis when there is enough
    # work, so v7x megacore can shard rows across both TensorCores.
    if Rs > STRIP and _cdiv(Rs, rb) < 2:
        rb = max(STRIP, _round_up(_cdiv(Rs, 2), STRIP))
    Rp = rb * _cdiv(Rs, rb)
    if Rp != R:
        x = jnp.pad(x, ((0, Rp - R), (0, 0)))

    kernel = functools.partial(
        _modwt_kernel, sel_lvls=sel_lvls, max_lvl=max_lvl,
        L=L, Lp=Lp, PL=PL, STRIP=STRIP)

    flops = 0
    for lvl in range(max_lvl + 1):
        per_out = (2 if lvl in sel_lvls else 0) + (2 if lvl < max_lvl else 0)
        flops += per_out * _NTAPS * R * L
    cost = pl.CostEstimate(flops=flops, transcendentals=0,
                           bytes_accessed=4 * R * L * (1 + num_sel))

    # TODO(synk): for the tiny-B*C / very-long-L regime, add a second (time)
    # grid axis with a ~(PL+PR)-lane recompute halo so both v7x TCs get work.
    out = pl.pallas_call(
        kernel,
        out_shape=jax.ShapeDtypeStruct((Rp, num_sel * Lp), jnp.float32),
        grid_spec=pltpu.PrefetchScalarGridSpec(
            num_scalar_prefetch=0,
            grid=(Rp // rb,),
            in_specs=[pl.BlockSpec((rb, L), lambda r: (r, 0))],
            out_specs=pl.BlockSpec((rb, num_sel * Lp), lambda r: (r, 0)),
            scratch_shapes=[pltpu.VMEM((rb, Wp), jnp.float32)],
        ),
        compiler_params=pltpu.CompilerParams(
            dimension_semantics=("parallel",),
            vmem_limit_bytes=32 * 1024 * 1024),
        cost_estimate=cost,
    )(x)

    out = out[:R].reshape(B, C, num_sel, Lp)
    if Lp != L:
        out = out[..., :L]
    return out


def modwt_ref(signal, selected_levels=(3, 4)):
    """Pure-JAX reference with the exact module semantics (for self-check)."""
    B, C, L = signal.shape
    approx = signal.astype(jnp.float32)
    details = []
    for lvl in range(max(selected_levels)):
        uf = 2 ** lvl
        K = _NTAPS * uf
        pad_l = (K - 1) // 2                  # PyTorch 'same' pads (K-1)//2 left
        pad_r = (K - 1) - pad_l
        ap = jnp.pad(approx, ((0, 0), (0, 0), (pad_l, pad_r)))
        detail = sum(float(H1[j]) * ap[:, :, j * uf:j * uf + L] for j in range(_NTAPS))
        approx = sum(float(H0[j]) * ap[:, :, j * uf:j * uf + L] for j in range(_NTAPS))
        details.append(detail)
    sel = [details[i - 1] for i in selected_levels]
    return jnp.stack(sel, axis=2)


if __name__ == "__main__":
    key = jax.random.PRNGKey(0)
    # channels = 1: the PyTorch module's grouped conv only supports C == 1.
    B, C, L = 4, 1, 256
    signal = jax.random.normal(key, (B, C, L), dtype=jnp.float32)

    out = modwt_forward(signal, selected_levels=(3, 4))
    out = jax.block_until_ready(out)

    assert out.shape == (B, C, 2, L), out.shape
    ref = modwt_ref(signal, selected_levels=(3, 4))
    np.testing.assert_allclose(np.asarray(out), np.asarray(ref), rtol=1e-4, atol=1e-4)
    print("KERNEL_OK")
</pallas_src>

<mosaic_0001>
module attributes {stable_mosaic.version = 11 : i64} {
  func.func @_modwt_kernel(%arg0: i32, %arg1: memref<32x256xf32, #tpu.memory_space<vmem>>, %arg2: memref<32x512xf32, #tpu.memory_space<vmem>>, %arg3: memref<32x512xf32, #tpu.memory_space<vmem>>) attributes {dimension_semantics = [#tpu.dimension_semantics<parallel>], iteration_bounds = array<i64: 1>, scalar_prefetch = 0 : i64, scratch_operands = 1 : i64, tpu.core_type = #tpu.core_type<tc>, window_params = [{transform_indices = @transform_0, window_bounds = array<i64: 32, 256>}, {transform_indices = @transform_1, window_bounds = array<i64: 32, 512>}]} {
    %cst = arith.constant 0.000000e+00 : f32
    %0 = vector.broadcast %cst : f32 to vector<32x128xf32>
    %c0 = arith.constant 0 : index
    %c0_0 = arith.constant 0 : index
    %1 = vector.load %arg3[%c0, %c0_0] : memref<32x512xf32, #tpu.memory_space<vmem>>, vector<32x128xf32>
    tpu.vector_store %arg3[%c0, %c0_0], %0 {strides = array<i32>} : memref<32x512xf32, #tpu.memory_space<vmem>>, vector<32x128xf32>,
    %c0_1 = arith.constant 0 : index
    %c0_2 = arith.constant 0 : index
    %2 = vector.load %arg1[%c0_1, %c0_2] : memref<32x256xf32, #tpu.memory_space<vmem>>, vector<32x256xf32>
    %c0_3 = arith.constant 0 : index
    %c128 = arith.constant 128 : index
    %3 = vector.load %arg3[%c0_3, %c128] : memref<32x512xf32, #tpu.memory_space<vmem>>, vector<32x256xf32>
    tpu.vector_store %arg3[%c0_3, %c128], %2 {strides = array<i32>} : memref<32x512xf32, #tpu.memory_space<vmem>>, vector<32x256xf32>,
    %cst_4 = arith.constant 0.000000e+00 : f32
    %4 = vector.broadcast %cst_4 : f32 to vector<32x128xf32>
    %c0_5 = arith.constant 0 : index
    %c384 = arith.constant 384 : index
    %5 = vector.load %arg3[%c0_5, %c384] : memref<32x512xf32, #tpu.memory_space<vmem>>, vector<32x128xf32>
    tpu.vector_store %arg3[%c0_5, %c384], %4 {strides = array<i32>} : memref<32x512xf32, #tpu.memory_space<vmem>>, vector<32x128xf32>,
    %c0_6 = arith.constant 0 : index
    %c125 = arith.constant 125 : index
    %6 = vector.load %arg3[%c0_6, %c125] : memref<32x512xf32, #tpu.memory_space<vmem>>, vector<32x256xf32>
    %cst_7 = arith.constant -0.075765714 : f32
    %7 = vector.broadcast %cst_7 : f32 to vector<32x256xf32>
    %8 = arith.mulf %7, %6 : vector<32x256xf32>
    %c0_8 = arith.constant 0 : index
    %c126 = arith.constant 126 : index
    %9 = vector.load %arg3[%c0_8, %c126] : memref<32x512xf32, #tpu.memory_space<vmem>>, vector<32x256xf32>
    %cst_9 = arith.constant -0.0296355281 : f32
    %10 = vector.broadcast %cst_9 : f32 to vector<32x256xf32>
    %11 = arith.mulf %10, %9 : vector<32x256xf32>
    %12 = arith.addf %8, %11 : vector<32x256xf32>
    %c0_10 = arith.constant 0 : index
    %c127 = arith.constant 127 : index
    %13 = vector.load %arg3[%c0_10, %c127] : memref<32x512xf32, #tpu.memory_space<vmem>>, vector<32x256xf32>
    %cst_11 = arith.constant 0.497618675 : f32
    %14 = vector.broadcast %cst_11 : f32 to vector<32x256xf32>
    %15 = arith.mulf %14, %13 : vector<32x256xf32>
    %16 = arith.addf %12, %15 : vector<32x256xf32>
    %c0_12 = arith.constant 0 : index
    %c128_13 = arith.constant 128 : index
    %17 = vector.load %arg3[%c0_12, %c128_13] : memref<32x512xf32, #tpu.memory_space<vmem>>, vector<32x256xf32>
    %cst_14 = arith.constant 0.803738772 : f32
    %18 = vector.broadcast %cst_14 : f32 to vector<32x256xf32>
    %19 = arith.mulf %18, %17 : vector<32x256xf32>
    %20 = arith.addf %16, %19 : vector<32x256xf32>
    %c0_15 = arith.constant 0 : index
    %c129 = arith.constant 129 : index
    %21 = vector.load %arg3[%c0_15, %c129] : memref<32x512xf32, #tpu.memory_space<vmem>>, vector<32x256xf32>
    %cst_16 = arith.constant 0.297857791 : f32
    %22 = vector.broadcast %cst_16 : f32 to vector<32x256xf32>
    %23 = arith.mulf %22, %21 : vector<32x256xf32>
    %24 = arith.addf %20, %23 : vector<32x256xf32>
    %c0_17 = arith.constant 0 : index
    %c130 = arith.constant 130 : index
    %25 = vector.load %arg3[%c0_17, %c130] : memref<32x512xf32, #tpu.memory_space<vmem>>, vector<32x256xf32>
    %cst_18 = arith.constant -0.0992195457 : f32
    %26 = vector.broadcast %cst_18 : f32 to vector<32x256xf32>
    %27 = arith.mulf %26, %25 : vector<32x256xf32>
    %28 = arith.addf %24, %27 : vector<32x256xf32>
    %c0_19 = arith.constant 0 : index
    %c131 = arith.constant 131 : index
    %29 = vector.load %arg3[%c0_19, %c131] : memref<32x512xf32, #tpu.memory_space<vmem>>, vector<32x256xf32>
    %cst_20 = arith.constant -0.0126039675 : f32
    %30 = vector.broadcast %cst_20 : f32 to vector<32x256xf32>
    %31 = arith.mulf %30, %29 : vector<32x256xf32>
    %32 = arith.addf %28, %31 : vector<32x256xf32>
    %c0_21 = arith.constant 0 : index
    %c132 = arith.constant 132 : index
    %33 = vector.load %arg3[%c0_21, %c132] : memref<32x512xf32, #tpu.memory_space<vmem>>, vector<32x256xf32>
    %cst_22 = arith.constant 3.222310e-02 : f32
    %34 = vector.broadcast %cst_22 : f32 to vector<32x256xf32>
    %35 = arith.mulf %34, %33 : vector<32x256xf32>
    %36 = arith.addf %32, %35 : vector<32x256xf32>
    %c0_23 = arith.constant 0 : index
    %c128_24 = arith.constant 128 : index
    %37 = vector.load %arg3[%c0_23, %c128_24] : memref<32x512xf32, #tpu.memory_space<vmem>>, vector<32x256xf32>
    tpu.vector_store %arg3[%c0_23, %c128_24], %36 {strides = array<i32>} : memref<32x512xf32, #tpu.memory_space<vmem>>, vector<32x256xf32>,
    %c0_25 = arith.constant 0 : index
    %c121 = arith.constant 121 : index
    %38 = vector.load %arg3[%c0_25, %c121] : memref<32x512xf32, #tpu.memory_space<vmem>>, vector<32x256xf32>
    %cst_26 = arith.constant -0.075765714 : f32
    %39 = vector.broadcast %cst_26 : f32 to vector<32x256xf32>
    %40 = arith.mulf %39, %38 : vector<32x256xf32>
    %c0_27 = arith.constant 0 : index
    %c123 = arith.constant 123 : index
    %41 = vector.load %arg3[%c0_27, %c123] : memref<32x512xf32, #tpu.memory_space<vmem>>, vector<32x256xf32>
    %cst_28 = arith.constant -0.0296355281 : f32
    %42 = vector.broadcast %cst_28 : f32 to vector<32x256xf32>
    %43 = arith.mulf %42, %41 : vector<32x256xf32>
    %44 = arith.addf %40, %43 : vector<32x256xf32>
    %c0_29 = arith.constant 0 : index
    %c125_30 = arith.constant 125 : index
    %45 = vector.load %arg3[%c0_29, %c125_30] : memref<32x512xf32, #tpu.memory_space<vmem>>, vector<32x256xf32>
    %cst_31 = arith.constant 0.497618675 : f32
    %46 = vector.broadcast %cst_31 : f32 to vector<32x256xf32>
    %47 = arith.mulf %46, %45 : vector<32x256xf32>
    %48 = arith.addf %44, %47 : vector<32x256xf32>
    %c0_32 = arith.constant 0 : index
    %c127_33 = arith.constant 127 : index
    %49 = vector.load %arg3[%c0_32, %c127_33] : memref<32x512xf32, #tpu.memory_space<vmem>>, vector<32x256xf32>
    %cst_34 = arith.constant 0.803738772 : f32
    %50 = vector.broadcast %cst_34 : f32 to vector<32x256xf32>
    %51 = arith.mulf %50, %49 : vector<32x256xf32>
    %52 = arith.addf %48, %51 : vector<32x256xf32>
    %c0_35 = arith.constant 0 : index
    %c129_36 = arith.constant 129 : index
    %53 = vector.load %arg3[%c0_35, %c129_36] : memref<32x512xf32, #tpu.memory_space<vmem>>, vector<32x256xf32>
    %cst_37 = arith.constant 0.297857791 : f32
    %54 = vector.broadcast %cst_37 : f32 to vector<32x256xf32>
    %55 = arith.mulf %54, %53 : vector<32x256xf32>
    %56 = arith.addf %52, %55 : vector<32x256xf32>
    %c0_38 = arith.constant 0 : index
    %c131_39 = arith.constant 131 : index
    %57 = vector.load %arg3[%c0_38, %c131_39] : memref<32x512xf32, #tpu.memory_space<vmem>>, vector<32x256xf32>
    %cst_40 = arith.constant -0.0992195457 : f32
    %58 = vector.broadcast %cst_40 : f32 to vector<32x256xf32>
    %59 = arith.mulf %58, %57 : vector<32x256xf32>
    %60 = arith.addf %56, %59 : vector<32x256xf32>
    %c0_41 = arith.constant 0 : index
    %c133 = arith.constant 133 : index
    %61 = vector.load %arg3[%c0_41, %c133] : memref<32x512xf32, #tpu.memory_space<vmem>>, vector<32x256xf32>
    %cst_42 = arith.constant -0.0126039675 : f32
    %62 = vector.broadcast %cst_42 : f32 to vector<32x256xf32>
    %63 = arith.mulf %62, %61 : vector<32x256xf32>
    %64 = arith.addf %60, %63 : vector<32x256xf32>
    %c0_43 = arith.constant 0 : index
    %c135 = arith.constant 135 : index
    %65 = vector.load %arg3[%c0_43, %c135] : memref<32x512xf32, #tpu.memory_space<vmem>>, vector<32x256xf32>
    %cst_44 = arith.constant 3.222310e-02 : f32
    %66 = vector.broadcast %cst_44 : f32 to vector<32x256xf32>
    %67 = arith.mulf %66, %65 : vector<32x256xf32>
    %68 = arith.addf %64, %67 : vector<32x256xf32>
    %c0_45 = arith.constant 0 : index
    %c128_46 = arith.constant 128 : index
    %69 = vector.load %arg3[%c0_45, %c128_46] : memref<32x512xf32, #tpu.memory_space<vmem>>, vector<32x256xf32>
    tpu.vector_store %arg3[%c0_45, %c128_46], %68 {strides = array<i32>} : memref<32x512xf32, #tpu.memory_space<vmem>>, vector<32x256xf32>,
    %c0_47 = arith.constant 0 : index
    %c113 = arith.constant 113 : index
    %70 = vector.load %arg3[%c0_47, %c113] : memref<32x512xf32, #tpu.memory_space<vmem>>, vector<32x256xf32>
    %cst_48 = arith.constant -3.222310e-02 : f32
    %71 = vector.broadcast %cst_48 : f32 to vector<32x256xf32>
    %72 = arith.mulf %71, %70 : vector<32x256xf32>
    %cst_49 = arith.constant -0.075765714 : f32
    %73 = vector.broadcast %cst_49 : f32 to vector<32x256xf32>
    %74 = arith.mulf %73, %70 : vector<32x256xf32>
    %c0_50 = arith.constant 0 : index
    %c117 = arith.constant 117 : index
    %75 = vector.load %arg3[%c0_50, %c117] : memref<32x512xf32, #tpu.memory_space<vmem>>, vector<32x256xf32>
    %cst_51 = arith.constant -0.0126039675 : f32
    %76 = vector.broadcast %cst_51 : f32 to vector<32x256xf32>
    %77 = arith.mulf %76, %75 : vector<32x256xf32>
    %78 = arith.addf %72, %77 : vector<32x256xf32>
    %cst_52 = arith.constant -0.0296355281 : f32
    %79 = vector.broadcast %cst_52 : f32 to vector<32x256xf32>
    %80 = arith.mulf %79, %75 : vector<32x256xf32>
    %81 = arith.addf %74, %80 : vector<32x256xf32>
    %c0_53 = arith.constant 0 : index
    %c121_54 = arith.constant 121 : index
    %82 = vector.load %arg3[%c0_53, %c121_54] : memref<32x512xf32, #tpu.memory_space<vmem>>, vector<32x256xf32>
    %cst_55 = arith.constant 0.0992195457 : f32
    %83 = vector.broadcast %cst_55 : f32 to vector<32x256xf32>
    %84 = arith.mulf %83, %82 : vector<32x256xf32>
    %85 = arith.addf %78, %84 : vector<32x256xf32>
    %cst_56 = arith.constant 0.497618675 : f32
    %86 = vector.broadcast %cst_56 : f32 to vector<32x256xf32>
    %87 = arith.mulf %86, %82 : vector<32x256xf32>
    %88 = arith.addf %81, %87 : vector<32x256xf32>
    %c0_57 = arith.constant 0 : index
    %c125_58 = arith.constant 125 : index
    %89 = vector.load %arg3[%c0_57, %c125_58] : memref<32x512xf32, #tpu.memory_space<vmem>>, vector<32x256xf32>
    %cst_59 = arith.constant 0.297857791 : f32
    %90 = vector.broadcast %cst_59 : f32 to vector<32x256xf32>
    %91 = arith.mulf %90, %89 : vector<32x256xf32>
    %92 = arith.addf %85, %91 : vector<32x256xf32>
    %cst_60 = arith.constant 0.803738772 : f32
    %93 = vector.broadcast %cst_60 : f32 to vector<32x256xf32>
    %94 = arith.mulf %93, %89 : vector<32x256xf32>
    %95 = arith.addf %88, %94 : vector<32x256xf32>
    %c0_61 = arith.constant 0 : index
    %c129_62 = arith.constant 129 : index
    %96 = vector.load %arg3[%c0_61, %c129_62] : memref<32x512xf32, #tpu.memory_space<vmem>>, vector<32x256xf32>
    %cst_63 = arith.constant -0.803738772 : f32
    %97 = vector.broadcast %cst_63 : f32 to vector<32x256xf32>
    %98 = arith.mulf %97, %96 : vector<32x256xf32>
    %99 = arith.addf %92, %98 : vector<32x256xf32>
    %cst_64 = arith.constant 0.297857791 : f32
    %100 = vector.broadcast %cst_64 : f32 to vector<32x256xf32>
    %101 = arith.mulf %100, %96 : vector<32x256xf32>
    %102 = arith.addf %95, %101 : vector<32x256xf32>
    %c0_65 = arith.constant 0 : index
    %c133_66 = arith.constant 133 : index
    %103 = vector.load %arg3[%c0_65, %c133_66] : memref<32x512xf32, #tpu.memory_space<vmem>>, vector<32x256xf32>
    %cst_67 = arith.constant 0.497618675 : f32
    %104 = vector.broadcast %cst_67 : f32 to vector<32x256xf32>
    %105 = arith.mulf %104, %103 : vector<32x256xf32>
    %106 = arith.addf %99, %105 : vector<32x256xf32>
    %cst_68 = arith.constant -0.0992195457 : f32
    %107 = vector.broadcast %cst_68 : f32 to vector<32x256xf32>
    %108 = arith.mulf %107, %103 : vector<32x256xf32>
    %109 = arith.addf %102, %108 : vector<32x256xf32>
    %c0_69 = arith.constant 0 : index
    %c137 = arith.constant 137 : index
    %110 = vector.load %arg3[%c0_69, %c137] : memref<32x512xf32, #tpu.memory_space<vmem>>, vector<32x256xf32>
    %cst_70 = arith.constant 0.0296355281 : f32
    %111 = vector.broadcast %cst_70 : f32 to vector<32x256xf32>
    %112 = arith.mulf %111, %110 : vector<32x256xf32>
    %113 = arith.addf %106, %112 : vector<32x256xf32>
    %cst_71 = arith.constant -0.0126039675 : f32
    %114 = vector.broadcast %cst_71 : f32 to vector<32x256xf32>
    %115 = arith.mulf %114, %110 : vector<32x256xf32>
    %116 = arith.addf %109, %115 : vector<32x256xf32>
    %c0_72 = arith.constant 0 : index
    %c141 = arith.constant 141 : index
    %117 = vector.load %arg3[%c0_72, %c141] : memref<32x512xf32, #tpu.memory_space<vmem>>, vector<32x256xf32>
    %cst_73 = arith.constant -0.075765714 : f32
    %118 = vector.broadcast %cst_73 : f32 to vector<32x256xf32>
    %119 = arith.mulf %118, %117 : vector<32x256xf32>
    %120 = arith.addf %113, %119 : vector<32x256xf32>
    %cst_74 = arith.constant 3.222310e-02 : f32
    %121 = vector.broadcast %cst_74 : f32 to vector<32x256xf32>
    %122 = arith.mulf %121, %117 : vector<32x256xf32>
    %123 = arith.addf %116, %122 : vector<32x256xf32>
    %c0_75 = arith.constant 0 : index
    %c0_76 = arith.constant 0 : index
    %124 = vector.load %arg2[%c0_75, %c0_76] : memref<32x512xf32, #tpu.memory_space<vmem>>, vector<32x256xf32>
    tpu.vector_store %arg2[%c0_75, %c0_76], %120 {strides = array<i32>} : memref<32x512xf32, #tpu.memory_space<vmem>>, vector<32x256xf32>,
    %c0_77 = arith.constant 0 : index
    %c128_78 = arith.constant 128 : index
    %125 = vector.load %arg3[%c0_77, %c128_78] : memref<32x512xf32, #tpu.memory_space<vmem>>, vector<32x256xf32>
    tpu.vector_store %arg3[%c0_77, %c128_78], %123 {strides = array<i32>} : memref<32x512xf32, #tpu.memory_space<vmem>>, vector<32x256xf32>,
    %c0_79 = arith.constant 0 : index
    %c97 = arith.constant 97 : index
    %126 = vector.load %arg3[%c0_79, %c97] : memref<32x512xf32, #tpu.memory_space<vmem>>, vector<32x256xf32>
    %cst_80 = arith.constant -3.222310e-02 : f32
    %127 = vector.broadcast %cst_80 : f32 to vector<32x256xf32>
    %128 = arith.mulf %127, %126 : vector<32x256xf32>
    %c0_81 = arith.constant 0 : index
    %c105 = arith.constant 105 : index
    %129 = vector.load %arg3[%c0_81, %c105] : memref<32x512xf32, #tpu.memory_space<vmem>>, vector<32x256xf32>
    %cst_82 = arith.constant -0.0126039675 : f32
    %130 = vector.broadcast %cst_82 : f32 to vector<32x256xf32>
    %131 = arith.mulf %130, %129 : vector<32x256xf32>
    %132 = arith.addf %128, %131 : vector<32x256xf32>
    %c0_83 = arith.constant 0 : index
    %c113_84 = arith.constant 113 : index
    %133 = vector.load %arg3[%c0_83, %c113_84] : memref<32x512xf32, #tpu.memory_space<vmem>>, vector<32x256xf32>
    %cst_85 = arith.constant 0.0992195457 : f32
    %134 = vector.broadcast %cst_85 : f32 to vector<32x256xf32>
    %135 = arith.mulf %134, %133 : vector<32x256xf32>
    %136 = arith.addf %132, %135 : vector<32x256xf32>
    %c0_86 = arith.constant 0 : index
    %c121_87 = arith.constant 121 : index
    %137 = vector.load %arg3[%c0_86, %c121_87] : memref<32x512xf32, #tpu.memory_space<vmem>>, vector<32x256xf32>
    %cst_88 = arith.constant 0.297857791 : f32
    %138 = vector.broadcast %cst_88 : f32 to vector<32x256xf32>
    %139 = arith.mulf %138, %137 : vector<32x256xf32>
    %140 = arith.addf %136, %139 : vector<32x256xf32>
    %c0_89 = arith.constant 0 : index
    %c129_90 = arith.constant 129 : index
    %141 = vector.load %arg3[%c0_89, %c129_90] : memref<32x512xf32, #tpu.memory_space<vmem>>, vector<32x256xf32>
    %cst_91 = arith.constant -0.803738772 : f32
    %142 = vector.broadcast %cst_91 : f32 to vector<32x256xf32>
    %143 = arith.mulf %142, %141 : vector<32x256xf32>
    %144 = arith.addf %140, %143 : vector<32x256xf32>
    %c0_92 = arith.constant 0 : index
    %c137_93 = arith.constant 137 : index
    %145 = vector.load %arg3[%c0_92, %c137_93] : memref<32x512xf32, #tpu.memory_space<vmem>>, vector<32x256xf32>
    %cst_94 = arith.constant 0.497618675 : f32
    %146 = vector.broadcast %cst_94 : f32 to vector<32x256xf32>
    %147 = arith.mulf %146, %145 : vector<32x256xf32>
    %148 = arith.addf %144, %147 : vector<32x256xf32>
    %c0_95 = arith.constant 0 : index
    %c145 = arith.constant 145 : index
    %149 = vector.load %arg3[%c0_95, %c145] : memref<32x512xf32, #tpu.memory_space<vmem>>, vector<32x256xf32>
    %cst_96 = arith.constant 0.0296355281 : f32
    %150 = vector.broadcast %cst_96 : f32 to vector<32x256xf32>
    %151 = arith.mulf %150, %149 : vector<32x256xf32>
    %152 = arith.addf %148, %151 : vector<32x256xf32>
    %c0_97 = arith.constant 0 : index
    %c153 = arith.constant 153 : index
    %153 = vector.load %arg3[%c0_97, %c153] : memref<32x512xf32, #tpu.memory_space<vmem>>, vector<32x256xf32>
    %cst_98 = arith.constant -0.075765714 : f32
    %154 = vector.broadcast %cst_98 : f32 to vector<32x256xf32>
    %155 = arith.mulf %154, %153 : vector<32x256xf32>
    %156 = arith.addf %152, %155 : vector<32x256xf32>
    %c0_99 = arith.constant 0 : index
    %c256 = arith.constant 256 : index
    %157 = vector.load %arg2[%c0_99, %c256] : memref<32x512xf32, #tpu.memory_space<vmem>>, vector<32x256xf32>
    tpu.vector_store %arg2[%c0_99, %c256], %156 {strides = array<i32>} : memref<32x512xf32, #tpu.memory_space<vmem>>, vector<32x256xf32>,
    return
  }
  func.func @transform_0(%arg0: i32) -> (i32, i32) {
    %c0_i32 = arith.constant 0 : i32
    %c0_i32_0 = arith.constant 0 : i32
    return %arg0, %c0_i32 : i32, i32
  }
  func.func @transform_1(%arg0: i32) -> (i32, i32) {
    %c0_i32 = arith.constant 0 : i32
    %c0_i32_0 = arith.constant 0 : i32
    return %arg0, %c0_i32 : i32, i32
  }
}

</mosaic_0001>

<llo_original>
// kernel: tpu_custom_call.1
$region0: #{tpu_custom_call.1}
  #allocation0 [shape = 'u32[]', space=smem, size = 0x4, offset = 0x4, fixed_abs, tag = 'smem constant byte address 0x4 - core index']
  #allocation1 [shape = 'u32[72,128]{1,0:T(1,128)}', space=vmem, size = 0x9000, scoped, tag = 'internal scratch']
  #allocation2 [shape = 'f32[32,512]{1,0:T(8,128)}', space=vmem, size = 0x10000, scoped, tag = 'scratch operand']
  %s0 = inlined_call_operand.hbm [shape: f32[32,256], index: 0, kind: input, shape index: {}]
  %s1 = inlined_call_operand.hbm [shape: f32[32,512], index: 1, kind: output, shape index: {}]
  %s2 = sld [smem:[#allocation0]]
  $region18: #{tpu_custom_call.1} parent=0
    _
  %s4 = ssub.s32 1, %s2
  %s5 = scalar_select 0, %s4, %s2
  $region1: #{tpu_custom_call.1} parent=0
    #allocation3 [shape = 'u8[32768]{0}', space=vmem, size = 0x8000, scoped, tag = 'input window, operand 0, single buffered']
    #allocation4 [shape = 's32[1]{0}', space=sflag, size = 0x4, scoped, tag = 'scoped memory for tpu_custom_call.1']
    #allocation5 [shape = 's32[1]{0}', space=sflag, size = 0x4, scoped, tag = 'scoped memory for tpu_custom_call.1']
    #allocation6 [shape = 'u8[65536]{0}', space=vmem, size = 0x10000, scoped, tag = 'output window, operand 0, single buffered']
    %6 = vsyncpa [#allocation4], 0
    %7 = vsyncpa [#allocation5], 0
    // Predicated region
    $region2: #{tpu_custom_call.1} parent=1 // pred_check
      _
    $region3: #{tpu_custom_call.1} parent=1 // pred_check_branch
      %9 = sbr.rel (0) target = $region5
    $region4: #{tpu_custom_call.1} parent=1 // pred_region
      %11 = vsyncadd [#allocation4], 0
      %s12 = sshll.u32 %s0, 4
      %s13 = int_to_ptr.hbm [resolvable:$true] %s12
      %s14 = sshll.u32 [#allocation3], 4
      %s15 = int_to_ptr.vmem [resolvable:$true] %s14
      %20 = dma.hbm_to_vmem [thread:$0]  %s13, 1024, %s15, [#allocation4], 256, 256, 16
    $region5: #{tpu_custom_call.1} parent=1 // pred_fallthru
      _
    // Predicated region
    $region6: #{tpu_custom_call.1} parent=1 // pred_check
      _
    $region7: #{tpu_custom_call.1} parent=1 // pred_check_branch
      %22 = sbr.rel (0) target = $region9
    $region8: #{tpu_custom_call.1} parent=1 // pred_region
      %24 = dma.done [#allocation4], 1024
    $region9: #{tpu_custom_call.1} parent=1 // pred_fallthru
      _
    %25 = vst [vmem:[#allocation2] sm:$0xff] 0.0
    %26 = vst [vmem:[#allocation2 + $0x20] sm:$0xff] 0.0
    %27 = vst [vmem:[#allocation2 + $0x40] sm:$0xff] 0.0
    %28 = vst [vmem:[#allocation2 + $0x60] sm:$0xff] 0.0
    %v29 = vld [vmem:[#allocation3] sm:$0xff]
    %v30 = vld [vmem:[#allocation3 + $0x8] sm:$0xff]
    %v31 = vld [vmem:[#allocation3 + $0x10] sm:$0xff]
    %v32 = vld [vmem:[#allocation3 + $0x18] sm:$0xff]
    %v33 = vld [vmem:[#allocation3 + $0x20] sm:$0xff]
    %v34 = vld [vmem:[#allocation3 + $0x28] sm:$0xff]
    %v35 = vld [vmem:[#allocation3 + $0x30] sm:$0xff]
    %v36 = vld [vmem:[#allocation3 + $0x38] sm:$0xff]
    %37 = vst [vmem:[#allocation2 + $0x8] sm:$0xff] %v29
    %38 = vst [vmem:[#allocation2 + $0x10] sm:$0xff] %v30
    %39 = vst [vmem:[#allocation2 + $0x28] sm:$0xff] %v31
    %40 = vst [vmem:[#allocation2 + $0x30] sm:$0xff] %v32
    %41 = vst [vmem:[#allocation2 + $0x48] sm:$0xff] %v33
    %42 = vst [vmem:[#allocation2 + $0x50] sm:$0xff] %v34
    %43 = vst [vmem:[#allocation2 + $0x68] sm:$0xff] %v35
    %44 = vst [vmem:[#allocation2 + $0x70] sm:$0xff] %v36
    %45 = vst [vmem:[#allocation2 + $0x18] sm:$0xff] 0.0
    %46 = vst [vmem:[#allocation2 + $0x38] sm:$0xff] 0.0
    %47 = vst [vmem:[#allocation2 + $0x58] sm:$0xff] 0.0
    %48 = vst [vmem:[#allocation2 + $0x78] sm:$0xff] 0.0
    %v49 = vld [vmem:[#allocation2] sm:$0xff]
    %v50 = vld [vmem:[#allocation2 + $0x8] sm:$0xff]
    %v51 = vld [vmem:[#allocation2 + $0x10] sm:$0xff]
    %v52 = vld [vmem:[#allocation2 + $0x20] sm:$0xff]
    %v53 = vld [vmem:[#allocation2 + $0x28] sm:$0xff]
    %v54 = vld [vmem:[#allocation2 + $0x30] sm:$0xff]
    %v55 = vld [vmem:[#allocation2 + $0x40] sm:$0xff]
    %v56 = vld [vmem:[#allocation2 + $0x48] sm:$0xff]
    %v57 = vld [vmem:[#allocation2 + $0x50] sm:$0xff]
    %v58 = vld [vmem:[#allocation2 + $0x60] sm:$0xff]
    %v59 = vld [vmem:[#allocation2 + $0x68] sm:$0xff]
    %v60 = vld [vmem:[#allocation2 + $0x70] sm:$0xff]
    %v61 = vmul.f32 %v49, -0.075765714
    %v62 = vmul.f32 %v50, -0.075765714
    %v63 = vmul.f32 %v51, -0.075765714
    %v64 = vmul.f32 %v52, -0.075765714
    %v65 = vmul.f32 %v53, -0.075765714
    %v66 = vmul.f32 %v54, -0.075765714
    %v67 = vmul.f32 %v55, -0.075765714
    %v68 = vmul.f32 %v56, -0.075765714
    %v69 = vmul.f32 %v57, -0.075765714
    %v70 = vmul.f32 %v58, -0.075765714
    %v71 = vmul.f32 %v59, -0.075765714
    %v72 = vmul.f32 %v60, -0.075765714
    %v73 = vmul.f32 %v49, -0.029635528
    %v74 = vmul.f32 %v50, -0.029635528
    %v75 = vmul.f32 %v51, -0.029635528
    %v76 = vmul.f32 %v52, -0.029635528
    %v77 = vmul.f32 %v53, -0.029635528
    %v78 = vmul.f32 %v54, -0.029635528
    %v79 = vmul.f32 %v55, -0.029635528
    %v80 = vmul.f32 %v56, -0.029635528
    %v81 = vmul.f32 %v57, -0.029635528
    %v82 = vmul.f32 %v58, -0.029635528
    %v83 = vmul.f32 %v59, -0.029635528
    %v84 = vmul.f32 %v60, -0.029635528
    %97 = vrot.lane.b32.xlu0 %v73, 127
    %v98 = vpop.permute.xlu0 %97
    %99 = vrot.lane.b32.xlu0 %v74, 127
    %v100 = vpop.permute.xlu0 %99
    %101 = vrot.lane.b32.xlu0 %v75, 127
    %v102 = vpop.permute.xlu0 %101
    %103 = vrot.lane.b32.xlu0 %v76, 127
    %v104 = vpop.permute.xlu0 %103
    %105 = vrot.lane.b32.xlu0 %v77, 127
    %v106 = vpop.permute.xlu0 %105
    %107 = vrot.lane.b32.xlu0 %v78, 127
    %v108 = vpop.permute.xlu0 %107
    %109 = vrot.lane.b32.xlu0 %v79, 127
    %v110 = vpop.permute.xlu0 %109
    %111 = vrot.lane.b32.xlu0 %v80, 127
    %v112 = vpop.permute.xlu0 %111
    %113 = vrot.lane.b32.xlu0 %v81, 127
    %v114 = vpop.permute.xlu0 %113
    %115 = vrot.lane.b32.xlu0 %v82, 127
    %v116 = vpop.permute.xlu0 %115
    %117 = vrot.lane.b32.xlu0 %v83, 127
    %v118 = vpop.permute.xlu0 %117
    %119 = vrot.lane.b32.xlu0 %v84, 127
    %v120 = vpop.permute.xlu0 %119
    %vm121 = vcmask 1039360
    %v122 = vsel %vm121, %v98, %v100
    %v123 = vsel %vm121, %v100, %v102
    %v124 = vsel %vm121, %v104, %v106
    %v125 = vsel %vm121, %v106, %v108
    %v126 = vsel %vm121, %v110, %v112
    %v127 = vsel %vm121, %v112, %v114
    %v128 = vsel %vm121, %v116, %v118
    %v129 = vsel %vm121, %v118, %v120
    %v142 = vadd.f32 %v61, %v122
    %v143 = vadd.f32 %v62, %v123
    %v144 = vadd.f32 %v63, %v102
    %v145 = vadd.f32 %v64, %v124
    %v146 = vadd.f32 %v65, %v125
    %v147 = vadd.f32 %v66, %v108
    %v148 = vadd.f32 %v67, %v126
    %v149 = vadd.f32 %v68, %v127
    %v150 = vadd.f32 %v69, %v114
    %v151 = vadd.f32 %v70, %v128
    %v152 = vadd.f32 %v71, %v129
    %v153 = vadd.f32 %v72, %v120
    %v154 = vmul.f32 %v49, 0.49761868
    %v155 = vmul.f32 %v50, 0.49761868
    %v156 = vmul.f32 %v51, 0.49761868
    %v157 = vmul.f32 %v52, 0.49761868
    %v158 = vmul.f32 %v53, 0.49761868
    %v159 = vmul.f32 %v54, 0.49761868
    %v160 = vmul.f32 %v55, 0.49761868
    %v161 = vmul.f32 %v56, 0.49761868
    %v162 = vmul.f32 %v57, 0.49761868
    %v163 = vmul.f32 %v58, 0.49761868
    %v164 = vmul.f32 %v59, 0.49761868
    %v165 = vmul.f32 %v60, 0.49761868
    %178 = vrot.lane.b32.xlu0 %v154, 126
    %v179 = vpop.permute.xlu0 %178
    %180 = vrot.lane.b32.xlu0 %v155, 126
    %v181 = vpop.permute.xlu0 %180
    %182 = vrot.lane.b32.xlu0 %v156, 126
    %v183 = vpop.permute.xlu0 %182
    %184 = vrot.lane.b32.xlu0 %v157, 126
    %v185 = vpop.permute.xlu0 %184
    %186 = vrot.lane.b32.xlu0 %v158, 126
    %v187 = vpop.permute.xlu0 %186
    %188 = vrot.lane.b32.xlu0 %v159, 126
    %v189 = vpop.permute.xlu0 %188
    %190 = vrot.lane.b32.xlu0 %v160, 126
    %v191 = vpop.permute.xlu0 %190
    %192 = vrot.lane.b32.xlu0 %v161, 126
    %v193 = vpop.permute.xlu0 %192
    %194 = vrot.lane.b32.xlu0 %v162, 126
    %v195 = vpop.permute.xlu0 %194
    %196 = vrot.lane.b32.xlu0 %v163, 126
    %v197 = vpop.permute.xlu0 %196
    %198 = vrot.lane.b32.xlu0 %v164, 126
    %v199 = vpop.permute.xlu0 %198
    %200 = vrot.lane.b32.xlu0 %v165, 126
    %v201 = vpop.permute.xlu0 %200
    %vm202 = vcmask 1031168
    %v203 = vsel %vm202, %v179, %v181
    %v204 = vsel %vm202, %v181, %v183
    %v205 = vsel %vm202, %v185, %v187
    %v206 = vsel %vm202, %v187, %v189
    %v207 = vsel %vm202, %v191, %v193
    %v208 = vsel %vm202, %v193, %v195
    %v209 = vsel %vm202, %v197, %v199
    %v210 = vsel %vm202, %v199, %v201
    %v223 = vadd.f32 %v142, %v203
    %v224 = vadd.f32 %v143, %v204
    %v225 = vadd.f32 %v144, %v183
    %v226 = vadd.f32 %v145, %v205
    %v227 = vadd.f32 %v146, %v206
    %v228 = vadd.f32 %v147, %v189
    %v229 = vadd.f32 %v148, %v207
    %v230 = vadd.f32 %v149, %v208
    %v231 = vadd.f32 %v150, %v195
    %v232 = vadd.f32 %v151, %v209
    %v233 = vadd.f32 %v152, %v210
    %v234 = vadd.f32 %v153, %v201
    %v235 = vmul.f32 %v50, 0.8037388
    %v236 = vmul.f32 %v51, 0.8037388
    %v237 = vmul.f32 %v53, 0.8037388
    %v238 = vmul.f32 %v54, 0.8037388
    %v239 = vmul.f32 %v56, 0.8037388
    %v240 = vmul.f32 %v57, 0.8037388
    %v241 = vmul.f32 %v59, 0.8037388
    %v242 = vmul.f32 %v60, 0.8037388
    %251 = vrot.lane.b32.xlu0 %v235, 125
    %v252 = vpop.permute.xlu0 %251
    %253 = vrot.lane.b32.xlu0 %v236, 125
    %v254 = vpop.permute.xlu0 %253
    %255 = vrot.lane.b32.xlu0 %v237, 125
    %v256 = vpop.permute.xlu0 %255
    %257 = vrot.lane.b32.xlu0 %v238, 125
    %v258 = vpop.permute.xlu0 %257
    %259 = vrot.lane.b32.xlu0 %v239, 125
    %v260 = vpop.permute.xlu0 %259
    %261 = vrot.lane.b32.xlu0 %v240, 125
    %v262 = vpop.permute.xlu0 %261
    %263 = vrot.lane.b32.xlu0 %v241, 125
    %v264 = vpop.permute.xlu0 %263
    %265 = vrot.lane.b32.xlu0 %v242, 125
    %v266 = vpop.permute.xlu0 %265
    %vm267 = vcmask 1022976
    %v268 = vsel %vm267, %v252, %v254
    %v269 = vsel %vm267, %v256, %v258
    %v270 = vsel %vm267, %v260, %v262
    %v271 = vsel %vm267, %v264, %v266
    %v284 = vadd.f32 %v223, %v252
    %v285 = vadd.f32 %v224, %v268
    %v286 = vadd.f32 %v225, %v254
    %v287 = vadd.f32 %v226, %v256
    %v288 = vadd.f32 %v227, %v269
    %v289 = vadd.f32 %v228, %v258
    %v290 = vadd.f32 %v229, %v260
    %v291 = vadd.f32 %v230, %v270
    %v292 = vadd.f32 %v231, %v262
    %v293 = vadd.f32 %v232, %v264
    %v294 = vadd.f32 %v233, %v271
    %v295 = vadd.f32 %v234, %v266
    %v296 = vld [vmem:[#allocation2 + $0x8] sm:$0xff]
    %v297 = vld [vmem:[#allocation2 + $0x10] sm:$0xff]
    %v298 = vld [vmem:[#allocation2 + $0x18] sm:$0xff]
    %v299 = vld [vmem:[#allocation2 + $0x28] sm:$0xff]
    %v300 = vld [vmem:[#allocation2 + $0x30] sm:$0xff]
    %v301 = vld [vmem:[#allocation2 + $0x38] sm:$0xff]
    %v302 = vld [vmem:[#allocation2 + $0x48] sm:$0xff]
    %v303 = vld [vmem:[#allocation2 + $0x50] sm:$0xff]
    %v304 = vld [vmem:[#allocation2 + $0x58] sm:$0xff]
    %v305 = vld [vmem:[#allocation2 + $0x68] sm:$0xff]
    %v306 = vld [vmem:[#allocation2 + $0x70] sm:$0xff]
    %v307 = vld [vmem:[#allocation2 + $0x78] sm:$0xff]
    %v308 = vmul.f32 %v296, 0.2978578
    %v309 = vmul.f32 %v297, 0.2978578
    %v310 = vmul.f32 %v298, 0.2978578
    %v311 = vmul.f32 %v299, 0.2978578
    %v312 = vmul.f32 %v300, 0.2978578
    %v313 = vmul.f32 %v301, 0.2978578
    %v314 = vmul.f32 %v302, 0.2978578
    %v315 = vmul.f32 %v303, 0.2978578
    %v316 = vmul.f32 %v304, 0.2978578
    %v317 = vmul.f32 %v305, 0.2978578
    %v318 = vmul.f32 %v306, 0.2978578
    %v319 = vmul.f32 %v307, 0.2978578
    %332 = vrot.lane.b32.xlu0 %v308, 124
    %v333 = vpop.permute.xlu0 %332
    %334 = vrot.lane.b32.xlu0 %v309, 124
    %v335 = vpop.permute.xlu0 %334
    %336 = vrot.lane.b32.xlu0 %v310, 124
    %v337 = vpop.permute.xlu0 %336
    %338 = vrot.lane.b32.xlu0 %v311, 124
    %v339 = vpop.permute.xlu0 %338
    %340 = vrot.lane.b32.xlu0 %v312, 124
    %v341 = vpop.permute.xlu0 %340
    %342 = vrot.lane.b32.xlu0 %v313, 124
    %v343 = vpop.permute.xlu0 %342
    %344 = vrot.lane.b32.xlu0 %v314, 124
    %v345 = vpop.permute.xlu0 %344
    %346 = vrot.lane.b32.xlu0 %v315, 124
    %v347 = vpop.permute.xlu0 %346
    %348 = vrot.lane.b32.xlu0 %v316, 124
    %v349 = vpop.permute.xlu0 %348
    %350 = vrot.lane.b32.xlu0 %v317, 124
    %v351 = vpop.permute.xlu0 %350
    %352 = vrot.lane.b32.xlu0 %v318, 124
    %v353 = vpop.permute.xlu0 %352
    %354 = vrot.lane.b32.xlu0 %v319, 124
    %v355 = vpop.permute.xlu0 %354
    %vm356 = vcmask 1014784
    %v357 = vsel %vm356, %v333, %v335
    %v358 = vsel %vm356, %v335, %v337
    %v359 = vsel %vm356, %v339, %v341
    %v360 = vsel %vm356, %v341, %v343
    %v361 = vsel %vm356, %v345, %v347
    %v362 = vsel %vm356, %v347, %v349
    %v363 = vsel %vm356, %v351, %v353
    %v364 = vsel %vm356, %v353, %v355
    %v377 = vadd.f32 %v284, %v333
    %v378 = vadd.f32 %v285, %v357
    %v379 = vadd.f32 %v286, %v358
    %v380 = vadd.f32 %v287, %v339
    %v381 = vadd.f32 %v288, %v359
    %v382 = vadd.f32 %v289, %v360
    %v383 = vadd.f32 %v290, %v345
    %v384 = vadd.f32 %v291, %v361
    %v385 = vadd.f32 %v292, %v362
    %v386 = vadd.f32 %v293, %v351
    %v387 = vadd.f32 %v294, %v363
    %v388 = vadd.f32 %v295, %v364
    %v389 = vmul.f32 %v296, -0.099219546
    %v390 = vmul.f32 %v297, -0.099219546
    %v391 = vmul.f32 %v298, -0.099219546
    %v392 = vmul.f32 %v299, -0.099219546
    %v393 = vmul.f32 %v300, -0.099219546
    %v394 = vmul.f32 %v301, -0.099219546
    %v395 = vmul.f32 %v302, -0.099219546
    %v396 = vmul.f32 %v303, -0.099219546
    %v397 = vmul.f32 %v304, -0.099219546
    %v398 = vmul.f32 %v305, -0.099219546
    %v399 = vmul.f32 %v306, -0.099219546
    %v400 = vmul.f32 %v307, -0.099219546
    %413 = vrot.lane.b32.xlu0 %v389, 123
    %v414 = vpop.permute.xlu0 %413
    %415 = vrot.lane.b32.xlu0 %v390, 123
    %v416 = vpop.permute.xlu0 %415
    %417 = vrot.lane.b32.xlu0 %v391, 123
    %v418 = vpop.permute.xlu0 %417
    %419 = vrot.lane.b32.xlu0 %v392, 123
    %v420 = vpop.permute.xlu0 %419
    %421 = vrot.lane.b32.xlu0 %v393, 123
    %v422 = vpop.permute.xlu0 %421
    %423 = vrot.lane.b32.xlu0 %v394, 123
    %v424 = vpop.permute.xlu0 %423
    %425 = vrot.lane.b32.xlu0 %v395, 123
    %v426 = vpop.permute.xlu0 %425
    %427 = vrot.lane.b32.xlu0 %v396, 123
    %v428 = vpop.permute.xlu0 %427
    %429 = vrot.lane.b32.xlu0 %v397, 123
    %v430 = vpop.permute.xlu0 %429
    %431 = vrot.lane.b32.xlu0 %v398, 123
    %v432 = vpop.permute.xlu0 %431
    %433 = vrot.lane.b32.xlu0 %v399, 123
    %v434 = vpop.permute.xlu0 %433
    %435 = vrot.lane.b32.xlu0 %v400, 123
    %v436 = vpop.permute.xlu0 %435
    %vm437 = vcmask 1006592
    %v438 = vsel %vm437, %v414, %v416
    %v439 = vsel %vm437, %v416, %v418
    %v440 = vsel %vm437, %v420, %v422
    %v441 = vsel %vm437, %v422, %v424
    %v442 = vsel %vm437, %v426, %v428
    %v443 = vsel %vm437, %v428, %v430
    %v444 = vsel %vm437, %v432, %v434
    %v445 = vsel %vm437, %v434, %v436
    %v458 = vadd.f32 %v377, %v414
    %v459 = vadd.f32 %v378, %v438
    %v460 = vadd.f32 %v379, %v439
    %v461 = vadd.f32 %v380, %v420
    %v462 = vadd.f32 %v381, %v440
    %v463 = vadd.f32 %v382, %v441
    %v464 = vadd.f32 %v383, %v426
    %v465 = vadd.f32 %v384, %v442
    %v466 = vadd.f32 %v385, %v443
    %v467 = vadd.f32 %v386, %v432
    %v468 = vadd.f32 %v387, %v444
    %v469 = vadd.f32 %v388, %v445
    %v470 = vmul.f32 %v296, -0.012603967
    %v471 = vmul.f32 %v297, -0.012603967
    %v472 = vmul.f32 %v298, -0.012603967
    %v473 = vmul.f32 %v299, -0.012603967
    %v474 = vmul.f32 %v300, -0.012603967
    %v475 = vmul.f32 %v301, -0.012603967
    %v476 = vmul.f32 %v302, -0.012603967
    %v477 = vmul.f32 %v303, -0.012603967
    %v478 = vmul.f32 %v304, -0.012603967
    %v479 = vmul.f32 %v305, -0.012603967
    %v480 = vmul.f32 %v306, -0.012603967
    %v481 = vmul.f32 %v307, -0.012603967
    %494 = vrot.lane.b32.xlu0 %v470, 122
    %v495 = vpop.permute.xlu0 %494
    %496 = vrot.lane.b32.xlu0 %v471, 122
    %v497 = vpop.permute.xlu0 %496
    %498 = vrot.lane.b32.xlu0 %v472, 122
    %v499 = vpop.permute.xlu0 %498
    %500 = vrot.lane.b32.xlu0 %v473, 122
    %v501 = vpop.permute.xlu0 %500
    %502 = vrot.lane.b32.xlu0 %v474, 122
    %v503 = vpop.permute.xlu0 %502
    %504 = vrot.lane.b32.xlu0 %v475, 122
    %v505 = vpop.permute.xlu0 %504
    %506 = vrot.lane.b32.xlu0 %v476, 122
    %v507 = vpop.permute.xlu0 %506
    %508 = vrot.lane.b32.xlu0 %v477, 122
    %v509 = vpop.permute.xlu0 %508
    %510 = vrot.lane.b32.xlu0 %v478, 122
    %v511 = vpop.permute.xlu0 %510
    %512 = vrot.lane.b32.xlu0 %v479, 122
    %v513 = vpop.permute.xlu0 %512
    %514 = vrot.lane.b32.xlu0 %v480, 122
    %v515 = vpop.permute.xlu0 %514
    %516 = vrot.lane.b32.xlu0 %v481, 122
    %v517 = vpop.permute.xlu0 %516
    %vm518 = vcmask 998400
    %v519 = vsel %vm518, %v495, %v497
    %v520 = vsel %vm518, %v497, %v499
    %v521 = vsel %vm518, %v501, %v503
    %v522 = vsel %vm518, %v503, %v505
    %v523 = vsel %vm518, %v507, %v509
    %v524 = vsel %vm518, %v509, %v511
    %v525 = vsel %vm518, %v513, %v515
    %v526 = vsel %vm518, %v515, %v517
    %v539 = vadd.f32 %v458, %v495
    %v540 = vadd.f32 %v459, %v519
    %v541 = vadd.f32 %v460, %v520
    %v542 = vadd.f32 %v461, %v501
    %v543 = vadd.f32 %v462, %v521
    %v544 = vadd.f32 %v463, %v522
    %v545 = vadd.f32 %v464, %v507
    %v546 = vadd.f32 %v465, %v523
    %v547 = vadd.f32 %v466, %v524
    %v548 = vadd.f32 %v467, %v513
    %v549 = vadd.f32 %v468, %v525
    %v550 = vadd.f32 %v469, %v526
    %v551 = vmul.f32 %v296, 0.0322231
    %v552 = vmul.f32 %v297, 0.0322231
    %v553 = vmul.f32 %v298, 0.0322231
    %v554 = vmul.f32 %v299, 0.0322231
    %v555 = vmul.f32 %v300, 0.0322231
    %v556 = vmul.f32 %v301, 0.0322231
    %v557 = vmul.f32 %v302, 0.0322231
    %v558 = vmul.f32 %v303, 0.0322231
    %v559 = vmul.f32 %v304, 0.0322231
    %v560 = vmul.f32 %v305, 0.0322231
    %v561 = vmul.f32 %v306, 0.0322231
    %v562 = vmul.f32 %v307, 0.0322231
    %575 = vrot.lane.b32.xlu0 %v551, 121
    %v576 = vpop.permute.xlu0 %575
    %577 = vrot.lane.b32.xlu0 %v552, 121
    %v578 = vpop.permute.xlu0 %577
    %579 = vrot.lane.b32.xlu0 %v553, 121
    %v580 = vpop.permute.xlu0 %579
    %581 = vrot.lane.b32.xlu0 %v554, 121
    %v582 = vpop.permute.xlu0 %581
    %583 = vrot.lane.b32.xlu0 %v555, 121
    %v584 = vpop.permute.xlu0 %583
    %585 = vrot.lane.b32.xlu0 %v556, 121
    %v586 = vpop.permute.xlu0 %585
    %587 = vrot.lane.b32.xlu0 %v557, 121
    %v588 = vpop.permute.xlu0 %587
    %589 = vrot.lane.b32.xlu0 %v558, 121
    %v590 = vpop.permute.xlu0 %589
    %591 = vrot.lane.b32.xlu0 %v559, 121
    %v592 = vpop.permute.xlu0 %591
    %593 = vrot.lane.b32.xlu0 %v560, 121
    %v594 = vpop.permute.xlu0 %593
    %595 = vrot.lane.b32.xlu0 %v561, 121
    %v596 = vpop.permute.xlu0 %595
    %597 = vrot.lane.b32.xlu0 %v562, 121
    %v598 = vpop.permute.xlu0 %597
    %vm599 = vcmask 990208
    %v600 = vsel %vm599, %v576, %v578
    %v601 = vsel %vm599, %v578, %v580
    %v602 = vsel %vm599, %v582, %v584
    %v603 = vsel %vm599, %v584, %v586
    %v604 = vsel %vm599, %v588, %v590
    %v605 = vsel %vm599, %v590, %v592
    %v606 = vsel %vm599, %v594, %v596
    %v607 = vsel %vm599, %v596, %v598
    %v620 = vadd.f32 %v539, %v576
    %v621 = vadd.f32 %v540, %v600
    %v622 = vadd.f32 %v541, %v601
    %v623 = vadd.f32 %v542, %v582
    %v624 = vadd.f32 %v543, %v602
    %v625 = vadd.f32 %v544, %v603
    %v626 = vadd.f32 %v545, %v588
    %v627 = vadd.f32 %v546, %v604
    %v628 = vadd.f32 %v547, %v605
    %v629 = vadd.f32 %v548, %v594
    %v630 = vadd.f32 %v549, %v606
    %v631 = vadd.f32 %v550, %v607
    %644 = vrot.lane.b32.xlu0 %v620, 3
    %v645 = vpop.permute.xlu0 %644
    %646 = vrot.lane.b32.xlu0 %v621, 3
    %v647 = vpop.permute.xlu0 %646
    %648 = vrot.lane.b32.xlu0 %v622, 3
    %v649 = vpop.permute.xlu0 %648
    %650 = vrot.lane.b32.xlu0 %v623, 3
    %v651 = vpop.permute.xlu0 %650
    %652 = vrot.lane.b32.xlu0 %v624, 3
    %v653 = vpop.permute.xlu0 %652
    %654 = vrot.lane.b32.xlu0 %v625, 3
    %v655 = vpop.permute.xlu0 %654
    %656 = vrot.lane.b32.xlu0 %v626, 3
    %v657 = vpop.permute.xlu0 %656
    %658 = vrot.lane.b32.xlu0 %v627, 3
    %v659 = vpop.permute.xlu0 %658
    %660 = vrot.lane.b32.xlu0 %v628, 3
    %v661 = vpop.permute.xlu0 %660
    %662 = vrot.lane.b32.xlu0 %v629, 3
    %v663 = vpop.permute.xlu0 %662
    %664 = vrot.lane.b32.xlu0 %v630, 3
    %v665 = vpop.permute.xlu0 %664
    %666 = vrot.lane.b32.xlu0 %v631, 3
    %v667 = vpop.permute.xlu0 %666
    %vm668 = vcmask 23552
    %v669 = vsel %vm668, %v645, %v647
    %v670 = vsel %vm668, %v647, %v649
    %v671 = vsel %vm668, %v651, %v653
    %v672 = vsel %vm668, %v653, %v655
    %v673 = vsel %vm668, %v657, %v659
    %v674 = vsel %vm668, %v659, %v661
    %v675 = vsel %vm668, %v663, %v665
    %v676 = vsel %vm668, %v665, %v667
    %685 = vst [vmem:[#allocation2 + $0x8] sm:$0xff] %v669
    %686 = vst [vmem:[#allocation2 + $0x10] sm:$0xff] %v670
    %687 = vst [vmem:[#allocation2 + $0x28] sm:$0xff] %v671
    %688 = vst [vmem:[#allocation2 + $0x30] sm:$0xff] %v672
    %689 = vst [vmem:[#allocation2 + $0x48] sm:$0xff] %v673
    %690 = vst [vmem:[#allocation2 + $0x50] sm:$0xff] %v674
    %691 = vst [vmem:[#allocation2 + $0x68] sm:$0xff] %v675
    %692 = vst [vmem:[#allocation2 + $0x70] sm:$0xff] %v676
    %v693 = vld [vmem:[#allocation2] sm:$0xff]
    %v694 = vld [vmem:[#allocation2 + $0x8] sm:$0xff]
    %v695 = vld [vmem:[#allocation2 + $0x10] sm:$0xff]
    %v696 = vld [vmem:[#allocation2 + $0x20] sm:$0xff]
    %v697 = vld [vmem:[#allocation2 + $0x28] sm:$0xff]
    %v698 = vld [vmem:[#allocation2 + $0x30] sm:$0xff]
    %v699 = vld [vmem:[#allocation2 + $0x40] sm:$0xff]
    %v700 = vld [vmem:[#allocation2 + $0x48] sm:$0xff]
    %v701 = vld [vmem:[#allocation2 + $0x50] sm:$0xff]
    %v702 = vld [vmem:[#allocation2 + $0x60] sm:$0xff]
    %v703 = vld [vmem:[#allocation2 + $0x68] sm:$0xff]
    %v704 = vld [vmem:[#allocation2 + $0x70] sm:$0xff]
    %v705 = vmul.f32 %v693, -0.075765714
    %v706 = vmul.f32 %v694, -0.075765714
    %v707 = vmul.f32 %v695, -0.075765714
    %v708 = vmul.f32 %v696, -0.075765714
    %v709 = vmul.f32 %v697, -0.075765714
    %v710 = vmul.f32 %v698, -0.075765714
    %v711 = vmul.f32 %v699, -0.075765714
    %v712 = vmul.f32 %v700, -0.075765714
    %v713 = vmul.f32 %v701, -0.075765714
    %v714 = vmul.f32 %v702, -0.075765714
    %v715 = vmul.f32 %v703, -0.075765714
    %v716 = vmul.f32 %v704, -0.075765714
    %v717 = vmul.f32 %v693, -0.029635528
    %v718 = vmul.f32 %v694, -0.029635528
    %v719 = vmul.f32 %v695, -0.029635528
    %v720 = vmul.f32 %v696, -0.029635528
    %v721 = vmul.f32 %v697, -0.029635528
    %v722 = vmul.f32 %v698, -0.029635528
    %v723 = vmul.f32 %v699, -0.029635528
    %v724 = vmul.f32 %v700, -0.029635528
    %v725 = vmul.f32 %v701, -0.029635528
    %v726 = vmul.f32 %v702, -0.029635528
    %v727 = vmul.f32 %v703, -0.029635528
    %v728 = vmul.f32 %v704, -0.029635528
    %741 = vrot.lane.b32.xlu0 %v717, 126
    %v742 = vpop.permute.xlu0 %741
    %743 = vrot.lane.b32.xlu0 %v718, 126
    %v744 = vpop.permute.xlu0 %743
    %745 = vrot.lane.b32.xlu0 %v719, 126
    %v746 = vpop.permute.xlu0 %745
    %747 = vrot.lane.b32.xlu0 %v720, 126
    %v748 = vpop.permute.xlu0 %747
    %749 = vrot.lane.b32.xlu0 %v721, 126
    %v750 = vpop.permute.xlu0 %749
    %751 = vrot.lane.b32.xlu0 %v722, 126
    %v752 = vpop.permute.xlu0 %751
    %753 = vrot.lane.b32.xlu0 %v723, 126
    %v754 = vpop.permute.xlu0 %753
    %755 = vrot.lane.b32.xlu0 %v724, 126
    %v756 = vpop.permute.xlu0 %755
    %757 = vrot.lane.b32.xlu0 %v725, 126
    %v758 = vpop.permute.xlu0 %757
    %759 = vrot.lane.b32.xlu0 %v726, 126
    %v760 = vpop.permute.xlu0 %759
    %761 = vrot.lane.b32.xlu0 %v727, 126
    %v762 = vpop.permute.xlu0 %761
    %763 = vrot.lane.b32.xlu0 %v728, 126
    %v764 = vpop.permute.xlu0 %763
    %v765 = vsel %vm202, %v742, %v744
    %v766 = vsel %vm202, %v744, %v746
    %v767 = vsel %vm202, %v748, %v750
    %v768 = vsel %vm202, %v750, %v752
    %v769 = vsel %vm202, %v754, %v756
    %v770 = vsel %vm202, %v756, %v758
    %v771 = vsel %vm202, %v760, %v762
    %v772 = vsel %vm202, %v762, %v764
    %v785 = vadd.f32 %v705, %v765
    %v786 = vadd.f32 %v706, %v766
    %v787 = vadd.f32 %v707, %v746
    %v788 = vadd.f32 %v708, %v767
    %v789 = vadd.f32 %v709, %v768
    %v790 = vadd.f32 %v710, %v752
    %v791 = vadd.f32 %v711, %v769
    %v792 = vadd.f32 %v712, %v770
    %v793 = vadd.f32 %v713, %v758
    %v794 = vadd.f32 %v714, %v771
    %v795 = vadd.f32 %v715, %v772
    %v796 = vadd.f32 %v716, %v764
    %v797 = vmul.f32 %v693, 0.49761868
    %v798 = vmul.f32 %v694, 0.49761868
    %v799 = vmul.f32 %v695, 0.49761868
    %v800 = vmul.f32 %v696, 0.49761868
    %v801 = vmul.f32 %v697, 0.49761868
    %v802 = vmul.f32 %v698, 0.49761868
    %v803 = vmul.f32 %v699, 0.49761868
    %v804 = vmul.f32 %v700, 0.49761868
    %v805 = vmul.f32 %v701, 0.49761868
    %v806 = vmul.f32 %v702, 0.49761868
    %v807 = vmul.f32 %v703, 0.49761868
    %v808 = vmul.f32 %v704, 0.49761868
    %821 = vrot.lane.b32.xlu0 %v797, 124
    %v822 = vpop.permute.xlu0 %821
    %823 = vrot.lane.b32.xlu0 %v798, 124
    %v824 = vpop.permute.xlu0 %823
    %825 = vrot.lane.b32.xlu0 %v799, 124
    %v826 = vpop.permute.xlu0 %825
    %827 = vrot.lane.b32.xlu0 %v800, 124
    %v828 = vpop.permute.xlu0 %827
    %829 = vrot.lane.b32.xlu0 %v801, 124
    %v830 = vpop.permute.xlu0 %829
    %831 = vrot.lane.b32.xlu0 %v802, 124
    %v832 = vpop.permute.xlu0 %831
    %833 = vrot.lane.b32.xlu0 %v803, 124
    %v834 = vpop.permute.xlu0 %833
    %835 = vrot.lane.b32.xlu0 %v804, 124
    %v836 = vpop.permute.xlu0 %835
    %837 = vrot.lane.b32.xlu0 %v805, 124
    %v838 = vpop.permute.xlu0 %837
    %839 = vrot.lane.b32.xlu0 %v806, 124
    %v840 = vpop.permute.xlu0 %839
    %841 = vrot.lane.b32.xlu0 %v807, 124
    %v842 = vpop.permute.xlu0 %841
    %843 = vrot.lane.b32.xlu0 %v808, 124
    %v844 = vpop.permute.xlu0 %843
    %v845 = vsel %vm356, %v822, %v824
    %v846 = vsel %vm356, %v824, %v826
    %v847 = vsel %vm356, %v828, %v830
    %v848 = vsel %vm356, %v830, %v832
    %v849 = vsel %vm356, %v834, %v836
    %v850 = vsel %vm356, %v836, %v838
    %v851 = vsel %vm356, %v840, %v842
    %v852 = vsel %vm356, %v842, %v844
    %v865 = vadd.f32 %v785, %v845
    %v866 = vadd.f32 %v786, %v846
    %v867 = vadd.f32 %v787, %v826
    %v868 = vadd.f32 %v788, %v847
    %v869 = vadd.f32 %v789, %v848
    %v870 = vadd.f32 %v790, %v832
    %v871 = vadd.f32 %v791, %v849
    %v872 = vadd.f32 %v792, %v850
    %v873 = vadd.f32 %v793, %v838
    %v874 = vadd.f32 %v794, %v851
    %v875 = vadd.f32 %v795, %v852
    %v876 = vadd.f32 %v796, %v844
    %v877 = vmul.f32 %v693, 0.8037388
    %v878 = vmul.f32 %v694, 0.8037388
    %v879 = vmul.f32 %v695, 0.8037388
    %v880 = vmul.f32 %v696, 0.8037388
    %v881 = vmul.f32 %v697, 0.8037388
    %v882 = vmul.f32 %v698, 0.8037388
    %v883 = vmul.f32 %v699, 0.8037388
    %v884 = vmul.f32 %v700, 0.8037388
    %v885 = vmul.f32 %v701, 0.8037388
    %v886 = vmul.f32 %v702, 0.8037388
    %v887 = vmul.f32 %v703, 0.8037388
    %v888 = vmul.f32 %v704, 0.8037388
    %901 = vrot.lane.b32.xlu0 %v877, 122
    %v902 = vpop.permute.xlu0 %901
    %903 = vrot.lane.b32.xlu0 %v878, 122
    %v904 = vpop.permute.xlu0 %903
    %905 = vrot.lane.b32.xlu0 %v879, 122
    %v906 = vpop.permute.xlu0 %905
    %907 = vrot.lane.b32.xlu0 %v880, 122
    %v908 = vpop.permute.xlu0 %907
    %909 = vrot.lane.b32.xlu0 %v881, 122
    %v910 = vpop.permute.xlu0 %909
    %911 = vrot.lane.b32.xlu0 %v882, 122
    %v912 = vpop.permute.xlu0 %911
    %913 = vrot.lane.b32.xlu0 %v883, 122
    %v914 = vpop.permute.xlu0 %913
    %915 = vrot.lane.b32.xlu0 %v884, 122
    %v916 = vpop.permute.xlu0 %915
    %917 = vrot.lane.b32.xlu0 %v885, 122
    %v918 = vpop.permute.xlu0 %917
    %919 = vrot.lane.b32.xlu0 %v886, 122
    %v920 = vpop.permute.xlu0 %919
    %921 = vrot.lane.b32.xlu0 %v887, 122
    %v922 = vpop.permute.xlu0 %921
    %923 = vrot.lane.b32.xlu0 %v888, 122
    %v924 = vpop.permute.xlu0 %923
    %v925 = vsel %vm518, %v902, %v904
    %v926 = vsel %vm518, %v904, %v906
    %v927 = vsel %vm518, %v908, %v910
    %v928 = vsel %vm518, %v910, %v912
    %v929 = vsel %vm518, %v914, %v916
    %v930 = vsel %vm518, %v916, %v918
    %v931 = vsel %vm518, %v920, %v922
    %v932 = vsel %vm518, %v922, %v924
    %v945 = vadd.f32 %v865, %v925
    %v946 = vadd.f32 %v866, %v926
    %v947 = vadd.f32 %v867, %v906
    %v948 = vadd.f32 %v868, %v927
    %v949 = vadd.f32 %v869, %v928
    %v950 = vadd.f32 %v870, %v912
    %v951 = vadd.f32 %v871, %v929
    %v952 = vadd.f32 %v872, %v930
    %v953 = vadd.f32 %v873, %v918
    %v954 = vadd.f32 %v874, %v931
    %v955 = vadd.f32 %v875, %v932
    %v956 = vadd.f32 %v876, %v924
    %v957 = vld [vmem:[#allocation2 + $0x8] sm:$0xff]
    %v958 = vld [vmem:[#allocation2 + $0x10] sm:$0xff]
    %v959 = vld [vmem:[#allocation2 + $0x18] sm:$0xff]
    %v960 = vld [vmem:[#allocation2 + $0x28] sm:$0xff]
    %v961 = vld [vmem:[#allocation2 + $0x30] sm:$0xff]
    %v962 = vld [vmem:[#allocation2 + $0x38] sm:$0xff]
    %v963 = vld [vmem:[#allocation2 + $0x48] sm:$0xff]
    %v964 = vld [vmem:[#allocation2 + $0x50] sm:$0xff]
    %v965 = vld [vmem:[#allocation2 + $0x58] sm:$0xff]
    %v966 = vld [vmem:[#allocation2 + $0x68] sm:$0xff]
    %v967 = vld [vmem:[#allocation2 + $0x70] sm:$0xff]
    %v968 = vld [vmem:[#allocation2 + $0x78] sm:$0xff]
    %v969 = vmul.f32 %v957, 0.2978578
    %v970 = vmul.f32 %v958, 0.2978578
    %v971 = vmul.f32 %v959, 0.2978578
    %v972 = vmul.f32 %v960, 0.2978578
    %v973 = vmul.f32 %v961, 0.2978578
    %v974 = vmul.f32 %v962, 0.2978578
    %v975 = vmul.f32 %v963, 0.2978578
    %v976 = vmul.f32 %v964, 0.2978578
    %v977 = vmul.f32 %v965, 0.2978578
    %v978 = vmul.f32 %v966, 0.2978578
    %v979 = vmul.f32 %v967, 0.2978578
    %v980 = vmul.f32 %v968, 0.2978578
    %993 = vrot.lane.b32.xlu0 %v969, 120
    %v994 = vpop.permute.xlu0 %993
    %995 = vrot.lane.b32.xlu0 %v970, 120
    %v996 = vpop.permute.xlu0 %995
    %997 = vrot.lane.b32.xlu0 %v971, 120
    %v998 = vpop.permute.xlu0 %997
    %999 = vrot.lane.b32.xlu0 %v972, 120
    %v1000 = vpop.permute.xlu0 %999
    %1001 = vrot.lane.b32.xlu0 %v973, 120
    %v1002 = vpop.permute.xlu0 %1001
    %1003 = vrot.lane.b32.xlu0 %v974, 120
    %v1004 = vpop.permute.xlu0 %1003
    %1005 = vrot.lane.b32.xlu0 %v975, 120
    %v1006 = vpop.permute.xlu0 %1005
    %1007 = vrot.lane.b32.xlu0 %v976, 120
    %v1008 = vpop.permute.xlu0 %1007
    %1009 = vrot.lane.b32.xlu0 %v977, 120
    %v1010 = vpop.permute.xlu0 %1009
    %1011 = vrot.lane.b32.xlu0 %v978, 120
    %v1012 = vpop.permute.xlu0 %1011
    %1013 = vrot.lane.b32.xlu0 %v979, 120
    %v1014 = vpop.permute.xlu0 %1013
    %1015 = vrot.lane.b32.xlu0 %v980, 120
    %v1016 = vpop.permute.xlu0 %1015
    %vm1017 = vcmask 982016
    %v1018 = vsel %vm1017, %v994, %v996
    %v1019 = vsel %vm1017, %v996, %v998
    %v1020 = vsel %vm1017, %v1000, %v1002
    %v1021 = vsel %vm1017, %v1002, %v1004
    %v1022 = vsel %vm1017, %v1006, %v1008
    %v1023 = vsel %vm1017, %v1008, %v1010
    %v1024 = vsel %vm1017, %v1012, %v1014
    %v1025 = vsel %vm1017, %v1014, %v1016
    %v1038 = vadd.f32 %v945, %v994
    %v1039 = vadd.f32 %v946, %v1018
    %v1040 = vadd.f32 %v947, %v1019
    %v1041 = vadd.f32 %v948, %v1000
    %v1042 = vadd.f32 %v949, %v1020
    %v1043 = vadd.f32 %v950, %v1021
    %v1044 = vadd.f32 %v951, %v1006
    %v1045 = vadd.f32 %v952, %v1022
    %v1046 = vadd.f32 %v953, %v1023
    %v1047 = vadd.f32 %v954, %v1012
    %v1048 = vadd.f32 %v955, %v1024
    %v1049 = vadd.f32 %v956, %v1025
    %v1050 = vmul.f32 %v957, -0.099219546
    %v1051 = vmul.f32 %v958, -0.099219546
    %v1052 = vmul.f32 %v959, -0.099219546
    %v1053 = vmul.f32 %v960, -0.099219546
    %v1054 = vmul.f32 %v961, -0.099219546
    %v1055 = vmul.f32 %v962, -0.099219546
    %v1056 = vmul.f32 %v963, -0.099219546
    %v1057 = vmul.f32 %v964, -0.099219546
    %v1058 = vmul.f32 %v965, -0.099219546
    %v1059 = vmul.f32 %v966, -0.099219546
    %v1060 = vmul.f32 %v967, -0.099219546
    %v1061 = vmul.f32 %v968, -0.099219546
    %1074 = vrot.lane.b32.xlu0 %v1050, 118
    %v1075 = vpop.permute.xlu0 %1074
    %1076 = vrot.lane.b32.xlu0 %v1051, 118
    %v1077 = vpop.permute.xlu0 %1076
    %1078 = vrot.lane.b32.xlu0 %v1052, 118
    %v1079 = vpop.permute.xlu0 %1078
    %1080 = vrot.lane.b32.xlu0 %v1053, 118
    %v1081 = vpop.permute.xlu0 %1080
    %1082 = vrot.lane.b32.xlu0 %v1054, 118
    %v1083 = vpop.permute.xlu0 %1082
    %1084 = vrot.lane.b32.xlu0 %v1055, 118
    %v1085 = vpop.permute.xlu0 %1084
    %1086 = vrot.lane.b32.xlu0 %v1056, 118
    %v1087 = vpop.permute.xlu0 %1086
    %1088 = vrot.lane.b32.xlu0 %v1057, 118
    %v1089 = vpop.permute.xlu0 %1088
    %1090 = vrot.lane.b32.xlu0 %v1058, 118
    %v1091 = vpop.permute.xlu0 %1090
    %1092 = vrot.lane.b32.xlu0 %v1059, 118
    %v1093 = vpop.permute.xlu0 %1092
    %1094 = vrot.lane.b32.xlu0 %v1060, 118
    %v1095 = vpop.permute.xlu0 %1094
    %1096 = vrot.lane.b32.xlu0 %v1061, 118
    %v1097 = vpop.permute.xlu0 %1096
    %vm1098 = vcmask 965632
    %v1099 = vsel %vm1098, %v1075, %v1077
    %v1100 = vsel %vm1098, %v1077, %v1079
    %v1101 = vsel %vm1098, %v1081, %v1083
    %v1102 = vsel %vm1098, %v1083, %v1085
    %v1103 = vsel %vm1098, %v1087, %v1089
    %v1104 = vsel %vm1098, %v1089, %v1091
    %v1105 = vsel %vm1098, %v1093, %v1095
    %v1106 = vsel %vm1098, %v1095, %v1097
    %v1119 = vadd.f32 %v1038, %v1075
    %v1120 = vadd.f32 %v1039, %v1099
    %v1121 = vadd.f32 %v1040, %v1100
    %v1122 = vadd.f32 %v1041, %v1081
    %v1123 = vadd.f32 %v1042, %v1101
    %v1124 = vadd.f32 %v1043, %v1102
    %v1125 = vadd.f32 %v1044, %v1087
    %v1126 = vadd.f32 %v1045, %v1103
    %v1127 = vadd.f32 %v1046, %v1104
    %v1128 = vadd.f32 %v1047, %v1093
    %v1129 = vadd.f32 %v1048, %v1105
    %v1130 = vadd.f32 %v1049, %v1106
    %v1131 = vmul.f32 %v957, -0.012603967
    %v1132 = vmul.f32 %v958, -0.012603967
    %v1133 = vmul.f32 %v959, -0.012603967
    %v1134 = vmul.f32 %v960, -0.012603967
    %v1135 = vmul.f32 %v961, -0.012603967
    %v1136 = vmul.f32 %v962, -0.012603967
    %v1137 = vmul.f32 %v963, -0.012603967
    %v1138 = vmul.f32 %v964, -0.012603967
    %v1139 = vmul.f32 %v965, -0.012603967
    %v1140 = vmul.f32 %v966, -0.012603967
    %v1141 = vmul.f32 %v967, -0.012603967
    %v1142 = vmul.f32 %v968, -0.012603967
    %1155 = vrot.lane.b32.xlu0 %v1131, 116
    %v1156 = vpop.permute.xlu0 %1155
    %1157 = vrot.lane.b32.xlu0 %v1132, 116
    %v1158 = vpop.permute.xlu0 %1157
    %1159 = vrot.lane.b32.xlu0 %v1133, 116
    %v1160 = vpop.permute.xlu0 %1159
    %1161 = vrot.lane.b32.xlu0 %v1134, 116
    %v1162 = vpop.permute.xlu0 %1161
    %1163 = vrot.lane.b32.xlu0 %v1135, 116
    %v1164 = vpop.permute.xlu0 %1163
    %1165 = vrot.lane.b32.xlu0 %v1136, 116
    %v1166 = vpop.permute.xlu0 %1165
    %1167 = vrot.lane.b32.xlu0 %v1137, 116
    %v1168 = vpop.permute.xlu0 %1167
    %1169 = vrot.lane.b32.xlu0 %v1138, 116
    %v1170 = vpop.permute.xlu0 %1169
    %1171 = vrot.lane.b32.xlu0 %v1139, 116
    %v1172 = vpop.permute.xlu0 %1171
    %1173 = vrot.lane.b32.xlu0 %v1140, 116
    %v1174 = vpop.permute.xlu0 %1173
    %1175 = vrot.lane.b32.xlu0 %v1141, 116
    %v1176 = vpop.permute.xlu0 %1175
    %1177 = vrot.lane.b32.xlu0 %v1142, 116
    %v1178 = vpop.permute.xlu0 %1177
    %vm1179 = vcmask 949248
    %v1180 = vsel %vm1179, %v1156, %v1158
    %v1181 = vsel %vm1179, %v1158, %v1160
    %v1182 = vsel %vm1179, %v1162, %v1164
    %v1183 = vsel %vm1179, %v1164, %v1166
    %v1184 = vsel %vm1179, %v1168, %v1170
    %v1185 = vsel %vm1179, %v1170, %v1172
    %v1186 = vsel %vm1179, %v1174, %v1176
    %v1187 = vsel %vm1179, %v1176, %v1178
    %v1200 = vadd.f32 %v1119, %v1156
    %v1201 = vadd.f32 %v1120, %v1180
    %v1202 = vadd.f32 %v1121, %v1181
    %v1203 = vadd.f32 %v1122, %v1162
    %v1204 = vadd.f32 %v1123, %v1182
    %v1205 = vadd.f32 %v1124, %v1183
    %v1206 = vadd.f32 %v1125, %v1168
    %v1207 = vadd.f32 %v1126, %v1184
    %v1208 = vadd.f32 %v1127, %v1185
    %v1209 = vadd.f32 %v1128, %v1174
    %v1210 = vadd.f32 %v1129, %v1186
    %v1211 = vadd.f32 %v1130, %v1187
    %v1212 = vmul.f32 %v957, 0.0322231
    %v1213 = vmul.f32 %v958, 0.0322231
    %v1214 = vmul.f32 %v959, 0.0322231
    %v1215 = vmul.f32 %v960, 0.0322231
    %v1216 = vmul.f32 %v961, 0.0322231
    %v1217 = vmul.f32 %v962, 0.0322231
    %v1218 = vmul.f32 %v963, 0.0322231
    %v1219 = vmul.f32 %v964, 0.0322231
    %v1220 = vmul.f32 %v965, 0.0322231
    %v1221 = vmul.f32 %v966, 0.0322231
    %v1222 = vmul.f32 %v967, 0.0322231
    %v1223 = vmul.f32 %v968, 0.0322231
    %1236 = vrot.lane.b32.xlu0 %v1212, 114
    %v1237 = vpop.permute.xlu0 %1236
    %1238 = vrot.lane.b32.xlu0 %v1213, 114
    %v1239 = vpop.permute.xlu0 %1238
    %1240 = vrot.lane.b32.xlu0 %v1214, 114
    %v1241 = vpop.permute.xlu0 %1240
    %1242 = vrot.lane.b32.xlu0 %v1215, 114
    %v1243 = vpop.permute.xlu0 %1242
    %1244 = vrot.lane.b32.xlu0 %v1216, 114
    %v1245 = vpop.permute.xlu0 %1244
    %1246 = vrot.lane.b32.xlu0 %v1217, 114
    %v1247 = vpop.permute.xlu0 %1246
    %1248 = vrot.lane.b32.xlu0 %v1218, 114
    %v1249 = vpop.permute.xlu0 %1248
    %1250 = vrot.lane.b32.xlu0 %v1219, 114
    %v1251 = vpop.permute.xlu0 %1250
    %1252 = vrot.lane.b32.xlu0 %v1220, 114
    %v1253 = vpop.permute.xlu0 %1252
    %1254 = vrot.lane.b32.xlu0 %v1221, 114
    %v1255 = vpop.permute.xlu0 %1254
    %1256 = vrot.lane.b32.xlu0 %v1222, 114
    %v1257 = vpop.permute.xlu0 %1256
    %1258 = vrot.lane.b32.xlu0 %v1223, 114
    %v1259 = vpop.permute.xlu0 %1258
    %vm1260 = vcmask 932864
    %v1261 = vsel %vm1260, %v1237, %v1239
    %v1262 = vsel %vm1260, %v1239, %v1241
    %v1263 = vsel %vm1260, %v1243, %v1245
    %v1264 = vsel %vm1260, %v1245, %v1247
    %v1265 = vsel %vm1260, %v1249, %v1251
    %v1266 = vsel %vm1260, %v1251, %v1253
    %v1267 = vsel %vm1260, %v1255, %v1257
    %v1268 = vsel %vm1260, %v1257, %v1259
    %v1281 = vadd.f32 %v1200, %v1237
    %v1282 = vadd.f32 %v1201, %v1261
    %v1283 = vadd.f32 %v1202, %v1262
    %v1284 = vadd.f32 %v1203, %v1243
    %v1285 = vadd.f32 %v1204, %v1263
    %v1286 = vadd.f32 %v1205, %v1264
    %v1287 = vadd.f32 %v1206, %v1249
    %v1288 = vadd.f32 %v1207, %v1265
    %v1289 = vadd.f32 %v1208, %v1266
    %v1290 = vadd.f32 %v1209, %v1255
    %v1291 = vadd.f32 %v1210, %v1267
    %v1292 = vadd.f32 %v1211, %v1268
    %1305 = vrot.lane.b32.xlu0 %v1281, 7
    %v1306 = vpop.permute.xlu0 %1305
    %1307 = vrot.lane.b32.xlu0 %v1282, 7
    %v1308 = vpop.permute.xlu0 %1307
    %1309 = vrot.lane.b32.xlu0 %v1283, 7
    %v1310 = vpop.permute.xlu0 %1309
    %1311 = vrot.lane.b32.xlu0 %v1284, 7
    %v1312 = vpop.permute.xlu0 %1311
    %1313 = vrot.lane.b32.xlu0 %v1285, 7
    %v1314 = vpop.permute.xlu0 %1313
    %1315 = vrot.lane.b32.xlu0 %v1286, 7
    %v1316 = vpop.permute.xlu0 %1315
    %1317 = vrot.lane.b32.xlu0 %v1287, 7
    %v1318 = vpop.permute.xlu0 %1317
    %1319 = vrot.lane.b32.xlu0 %v1288, 7
    %v1320 = vpop.permute.xlu0 %1319
    %1321 = vrot.lane.b32.xlu0 %v1289, 7
    %v1322 = vpop.permute.xlu0 %1321
    %1323 = vrot.lane.b32.xlu0 %v1290, 7
    %v1324 = vpop.permute.xlu0 %1323
    %1325 = vrot.lane.b32.xlu0 %v1291, 7
    %v1326 = vpop.permute.xlu0 %1325
    %1327 = vrot.lane.b32.xlu0 %v1292, 7
    %v1328 = vpop.permute.xlu0 %1327
    %vm1329 = vcmask 56320
    %v1330 = vsel %vm1329, %v1306, %v1308
    %v1331 = vsel %vm1329, %v1308, %v1310
    %v1332 = vsel %vm1329, %v1312, %v1314
    %v1333 = vsel %vm1329, %v1314, %v1316
    %v1334 = vsel %vm1329, %v1318, %v1320
    %v1335 = vsel %vm1329, %v1320, %v1322
    %v1336 = vsel %vm1329, %v1324, %v1326
    %v1337 = vsel %vm1329, %v1326, %v1328
    %1346 = vst [vmem:[#allocation2 + $0x8] sm:$0xff] %v1330
    %1347 = vst [vmem:[#allocation2 + $0x10] sm:$0xff] %v1331
    %1348 = vst [vmem:[#allocation2 + $0x28] sm:$0xff] %v1332
    %1349 = vst [vmem:[#allocation2 + $0x30] sm:$0xff] %v1333
    %1350 = vst [vmem:[#allocation2 + $0x48] sm:$0xff] %v1334
    %1351 = vst [vmem:[#allocation2 + $0x50] sm:$0xff] %v1335
    %1352 = vst [vmem:[#allocation2 + $0x68] sm:$0xff] %v1336
    %1353 = vst [vmem:[#allocation2 + $0x70] sm:$0xff] %v1337
    %v1354 = vld [vmem:[#allocation2] sm:$0xff]
    %v1355 = vld [vmem:[#allocation2 + $0x8] sm:$0xff]
    %v1356 = vld [vmem:[#allocation2 + $0x10] sm:$0xff]
    %v1357 = vld [vmem:[#allocation2 + $0x20] sm:$0xff]
    %v1358 = vld [vmem:[#allocation2 + $0x28] sm:$0xff]
    %v1359 = vld [vmem:[#allocation2 + $0x30] sm:$0xff]
    %v1360 = vld [vmem:[#allocation2 + $0x40] sm:$0xff]
    %v1361 = vld [vmem:[#allocation2 + $0x48] sm:$0xff]
    %v1362 = vld [vmem:[#allocation2 + $0x50] sm:$0xff]
    %v1363 = vld [vmem:[#allocation2 + $0x60] sm:$0xff]
    %v1364 = vld [vmem:[#allocation2 + $0x68] sm:$0xff]
    %v1365 = vld [vmem:[#allocation2 + $0x70] sm:$0xff]
    %v1366 = vmul.f32 %v1354, -0.0322231
    %v1367 = vmul.f32 %v1355, -0.0322231
    %v1368 = vmul.f32 %v1356, -0.0322231
    %v1369 = vmul.f32 %v1357, -0.0322231
    %v1370 = vmul.f32 %v1358, -0.0322231
    %v1371 = vmul.f32 %v1359, -0.0322231
    %v1372 = vmul.f32 %v1360, -0.0322231
    %v1373 = vmul.f32 %v1361, -0.0322231
    %v1374 = vmul.f32 %v1362, -0.0322231
    %v1375 = vmul.f32 %v1363, -0.0322231
    %v1376 = vmul.f32 %v1364, -0.0322231
    %v1377 = vmul.f32 %v1365, -0.0322231
    %v1378 = vmul.f32 %v1354, -0.075765714
    %v1379 = vmul.f32 %v1355, -0.075765714
    %v1380 = vmul.f32 %v1356, -0.075765714
    %v1381 = vmul.f32 %v1357, -0.075765714
    %v1382 = vmul.f32 %v1358, -0.075765714
    %v1383 = vmul.f32 %v1359, -0.075765714
    %v1384 = vmul.f32 %v1360, -0.075765714
    %v1385 = vmul.f32 %v1361, -0.075765714
    %v1386 = vmul.f32 %v1362, -0.075765714
    %v1387 = vmul.f32 %v1363, -0.075765714
    %v1388 = vmul.f32 %v1364, -0.075765714
    %v1389 = vmul.f32 %v1365, -0.075765714
    %v1390 = vmul.f32 %v1354, -0.012603967
    %v1391 = vmul.f32 %v1355, -0.012603967
    %v1392 = vmul.f32 %v1356, -0.012603967
    %v1393 = vmul.f32 %v1357, -0.012603967
    %v1394 = vmul.f32 %v1358, -0.012603967
    %v1395 = vmul.f32 %v1359, -0.012603967
    %v1396 = vmul.f32 %v1360, -0.012603967
    %v1397 = vmul.f32 %v1361, -0.012603967
    %v1398 = vmul.f32 %v1362, -0.012603967
    %v1399 = vmul.f32 %v1363, -0.012603967
    %v1400 = vmul.f32 %v1364, -0.012603967
    %v1401 = vmul.f32 %v1365, -0.012603967
    %1414 = vrot.lane.b32.xlu0 %v1390, 124
    %v1415 = vpop.permute.xlu0 %1414
    %1416 = vrot.lane.b32.xlu0 %v1391, 124
    %v1417 = vpop.permute.xlu0 %1416
    %1418 = vrot.lane.b32.xlu0 %v1392, 124
    %v1419 = vpop.permute.xlu0 %1418
    %1420 = vrot.lane.b32.xlu0 %v1393, 124
    %v1421 = vpop.permute.xlu0 %1420
    %1422 = vrot.lane.b32.xlu0 %v1394, 124
    %v1423 = vpop.permute.xlu0 %1422
    %1424 = vrot.lane.b32.xlu0 %v1395, 124
    %v1425 = vpop.permute.xlu0 %1424
    %1426 = vrot.lane.b32.xlu0 %v1396, 124
    %v1427 = vpop.permute.xlu0 %1426
    %1428 = vrot.lane.b32.xlu0 %v1397, 124
    %v1429 = vpop.permute.xlu0 %1428
    %1430 = vrot.lane.b32.xlu0 %v1398, 124
    %v1431 = vpop.permute.xlu0 %1430
    %1432 = vrot.lane.b32.xlu0 %v1399, 124
    %v1433 = vpop.permute.xlu0 %1432
    %1434 = vrot.lane.b32.xlu0 %v1400, 124
    %v1435 = vpop.permute.xlu0 %1434
    %1436 = vrot.lane.b32.xlu0 %v1401, 124
    %v1437 = vpop.permute.xlu0 %1436
    %v1438 = vsel %vm356, %v1415, %v1417
    %v1439 = vsel %vm356, %v1417, %v1419
    %v1440 = vsel %vm356, %v1421, %v1423
    %v1441 = vsel %vm356, %v1423, %v1425
    %v1442 = vsel %vm356, %v1427, %v1429
    %v1443 = vsel %vm356, %v1429, %v1431
    %v1444 = vsel %vm356, %v1433, %v1435
    %v1445 = vsel %vm356, %v1435, %v1437
    %v1458 = vadd.f32 %v1366, %v1438
    %v1459 = vadd.f32 %v1367, %v1439
    %v1460 = vadd.f32 %v1368, %v1419
    %v1461 = vadd.f32 %v1369, %v1440
    %v1462 = vadd.f32 %v1370, %v1441
    %v1463 = vadd.f32 %v1371, %v1425
    %v1464 = vadd.f32 %v1372, %v1442
    %v1465 = vadd.f32 %v1373, %v1443
    %v1466 = vadd.f32 %v1374, %v1431
    %v1467 = vadd.f32 %v1375, %v1444
    %v1468 = vadd.f32 %v1376, %v1445
    %v1469 = vadd.f32 %v1377, %v1437
    %v1470 = vmul.f32 %v1354, -0.029635528
    %v1471 = vmul.f32 %v1355, -0.029635528
    %v1472 = vmul.f32 %v1356, -0.029635528
    %v1473 = vmul.f32 %v1357, -0.029635528
    %v1474 = vmul.f32 %v1358, -0.029635528
    %v1475 = vmul.f32 %v1359, -0.029635528
    %v1476 = vmul.f32 %v1360, -0.029635528
    %v1477 = vmul.f32 %v1361, -0.029635528
    %v1478 = vmul.f32 %v1362, -0.029635528
    %v1479 = vmul.f32 %v1363, -0.029635528
    %v1480 = vmul.f32 %v1364, -0.029635528
    %v1481 = vmul.f32 %v1365, -0.029635528
    %1494 = vrot.lane.b32.xlu0 %v1470, 124
    %v1495 = vpop.permute.xlu0 %1494
    %1496 = vrot.lane.b32.xlu0 %v1471, 124
    %v1497 = vpop.permute.xlu0 %1496
    %1498 = vrot.lane.b32.xlu0 %v1472, 124
    %v1499 = vpop.permute.xlu0 %1498
    %1500 = vrot.lane.b32.xlu0 %v1473, 124
    %v1501 = vpop.permute.xlu0 %1500
    %1502 = vrot.lane.b32.xlu0 %v1474, 124
    %v1503 = vpop.permute.xlu0 %1502
    %1504 = vrot.lane.b32.xlu0 %v1475, 124
    %v1505 = vpop.permute.xlu0 %1504
    %1506 = vrot.lane.b32.xlu0 %v1476, 124
    %v1507 = vpop.permute.xlu0 %1506
    %1508 = vrot.lane.b32.xlu0 %v1477, 124
    %v1509 = vpop.permute.xlu0 %1508
    %1510 = vrot.lane.b32.xlu0 %v1478, 124
    %v1511 = vpop.permute.xlu0 %1510
    %1512 = vrot.lane.b32.xlu0 %v1479, 124
    %v1513 = vpop.permute.xlu0 %1512
    %1514 = vrot.lane.b32.xlu0 %v1480, 124
    %v1515 = vpop.permute.xlu0 %1514
    %1516 = vrot.lane.b32.xlu0 %v1481, 124
    %v1517 = vpop.permute.xlu0 %1516
    %v1518 = vsel %vm356, %v1495, %v1497
    %v1519 = vsel %vm356, %v1497, %v1499
    %v1520 = vsel %vm356, %v1501, %v1503
    %v1521 = vsel %vm356, %v1503, %v1505
    %v1522 = vsel %vm356, %v1507, %v1509
    %v1523 = vsel %vm356, %v1509, %v1511
    %v1524 = vsel %vm356, %v1513, %v1515
    %v1525 = vsel %vm356, %v1515, %v1517
    %v1538 = vadd.f32 %v1378, %v1518
    %v1539 = vadd.f32 %v1379, %v1519
    %v1540 = vadd.f32 %v1380, %v1499
    %v1541 = vadd.f32 %v1381, %v1520
    %v1542 = vadd.f32 %v1382, %v1521
    %v1543 = vadd.f32 %v1383, %v1505
    %v1544 = vadd.f32 %v1384, %v1522
    %v1545 = vadd.f32 %v1385, %v1523
    %v1546 = vadd.f32 %v1386, %v1511
    %v1547 = vadd.f32 %v1387, %v1524
    %v1548 = vadd.f32 %v1388, %v1525
    %v1549 = vadd.f32 %v1389, %v1517
    %v1550 = vmul.f32 %v1354, 0.099219546
    %v1551 = vmul.f32 %v1355, 0.099219546
    %v1552 = vmul.f32 %v1356, 0.099219546
    %v1553 = vmul.f32 %v1357, 0.099219546
    %v1554 = vmul.f32 %v1358, 0.099219546
    %v1555 = vmul.f32 %v1359, 0.099219546
    %v1556 = vmul.f32 %v1360, 0.099219546
    %v1557 = vmul.f32 %v1361, 0.099219546
    %v1558 = vmul.f32 %v1362, 0.099219546
    %v1559 = vmul.f32 %v1363, 0.099219546
    %v1560 = vmul.f32 %v1364, 0.099219546
    %v1561 = vmul.f32 %v1365, 0.099219546
    %1574 = vrot.lane.b32.xlu0 %v1550, 120
    %v1575 = vpop.permute.xlu0 %1574
    %1576 = vrot.lane.b32.xlu0 %v1551, 120
    %v1577 = vpop.permute.xlu0 %1576
    %1578 = vrot.lane.b32.xlu0 %v1552, 120
    %v1579 = vpop.permute.xlu0 %1578
    %1580 = vrot.lane.b32.xlu0 %v1553, 120
    %v1581 = vpop.permute.xlu0 %1580
    %1582 = vrot.lane.b32.xlu0 %v1554, 120
    %v1583 = vpop.permute.xlu0 %1582
    %1584 = vrot.lane.b32.xlu0 %v1555, 120
    %v1585 = vpop.permute.xlu0 %1584
    %1586 = vrot.lane.b32.xlu0 %v1556, 120
    %v1587 = vpop.permute.xlu0 %1586
    %1588 = vrot.lane.b32.xlu0 %v1557, 120
    %v1589 = vpop.permute.xlu0 %1588
    %1590 = vrot.lane.b32.xlu0 %v1558, 120
    %v1591 = vpop.permute.xlu0 %1590
    %1592 = vrot.lane.b32.xlu0 %v1559, 120
    %v1593 = vpop.permute.xlu0 %1592
    %1594 = vrot.lane.b32.xlu0 %v1560, 120
    %v1595 = vpop.permute.xlu0 %1594
    %1596 = vrot.lane.b32.xlu0 %v1561, 120
    %v1597 = vpop.permute.xlu0 %1596
    %v1598 = vsel %vm1017, %v1575, %v1577
    %v1599 = vsel %vm1017, %v1577, %v1579
    %v1600 = vsel %vm1017, %v1581, %v1583
    %v1601 = vsel %vm1017, %v1583, %v1585
    %v1602 = vsel %vm1017, %v1587, %v1589
    %v1603 = vsel %vm1017, %v1589, %v1591
    %v1604 = vsel %vm1017, %v1593, %v1595
    %v1605 = vsel %vm1017, %v1595, %v1597
    %v1618 = vadd.f32 %v1458, %v1598
    %v1619 = vadd.f32 %v1459, %v1599
    %v1620 = vadd.f32 %v1460, %v1579
    %v1621 = vadd.f32 %v1461, %v1600
    %v1622 = vadd.f32 %v1462, %v1601
    %v1623 = vadd.f32 %v1463, %v1585
    %v1624 = vadd.f32 %v1464, %v1602
    %v1625 = vadd.f32 %v1465, %v1603
    %v1626 = vadd.f32 %v1466, %v1591
    %v1627 = vadd.f32 %v1467, %v1604
    %v1628 = vadd.f32 %v1468, %v1605
    %v1629 = vadd.f32 %v1469, %v1597
    %v1630 = vmul.f32 %v1354, 0.49761868
    %v1631 = vmul.f32 %v1355, 0.49761868
    %v1632 = vmul.f32 %v1356, 0.49761868
    %v1633 = vmul.f32 %v1357, 0.49761868
    %v1634 = vmul.f32 %v1358, 0.49761868
    %v1635 = vmul.f32 %v1359, 0.49761868
    %v1636 = vmul.f32 %v1360, 0.49761868
    %v1637 = vmul.f32 %v1361, 0.49761868
    %v1638 = vmul.f32 %v1362, 0.49761868
    %v1639 = vmul.f32 %v1363, 0.49761868
    %v1640 = vmul.f32 %v1364, 0.49761868
    %v1641 = vmul.f32 %v1365, 0.49761868
    %1654 = vrot.lane.b32.xlu0 %v1630, 120
    %v1655 = vpop.permute.xlu0 %1654
    %1656 = vrot.lane.b32.xlu0 %v1631, 120
    %v1657 = vpop.permute.xlu0 %1656
    %1658 = vrot.lane.b32.xlu0 %v1632, 120
    %v1659 = vpop.permute.xlu0 %1658
    %1660 = vrot.lane.b32.xlu0 %v1633, 120
    %v1661 = vpop.permute.xlu0 %1660
    %1662 = vrot.lane.b32.xlu0 %v1634, 120
    %v1663 = vpop.permute.xlu0 %1662
    %1664 = vrot.lane.b32.xlu0 %v1635, 120
    %v1665 = vpop.permute.xlu0 %1664
    %1666 = vrot.lane.b32.xlu0 %v1636, 120
    %v1667 = vpop.permute.xlu0 %1666
    %1668 = vrot.lane.b32.xlu0 %v1637, 120
    %v1669 = vpop.permute.xlu0 %1668
    %1670 = vrot.lane.b32.xlu0 %v1638, 120
    %v1671 = vpop.permute.xlu0 %1670
    %1672 = vrot.lane.b32.xlu0 %v1639, 120
    %v1673 = vpop.permute.xlu0 %1672
    %1674 = vrot.lane.b32.xlu0 %v1640, 120
    %v1675 = vpop.permute.xlu0 %1674
    %1676 = vrot.lane.b32.xlu0 %v1641, 120
    %v1677 = vpop.permute.xlu0 %1676
    %v1678 = vsel %vm1017, %v1655, %v1657
    %v1679 = vsel %vm1017, %v1657, %v1659
    %v1680 = vsel %vm1017, %v1661, %v1663
    %v1681 = vsel %vm1017, %v1663, %v1665
    %v1682 = vsel %vm1017, %v1667, %v1669
    %v1683 = vsel %vm1017, %v1669, %v1671
    %v1684 = vsel %vm1017, %v1673, %v1675
    %v1685 = vsel %vm1017, %v1675, %v1677
    %v1698 = vadd.f32 %v1538, %v1678
    %v1699 = vadd.f32 %v1539, %v1679
    %v1700 = vadd.f32 %v1540, %v1659
    %v1701 = vadd.f32 %v1541, %v1680
    %v1702 = vadd.f32 %v1542, %v1681
    %v1703 = vadd.f32 %v1543, %v1665
    %v1704 = vadd.f32 %v1544, %v1682
    %v1705 = vadd.f32 %v1545, %v1683
    %v1706 = vadd.f32 %v1546, %v1671
    %v1707 = vadd.f32 %v1547, %v1684
    %v1708 = vadd.f32 %v1548, %v1685
    %v1709 = vadd.f32 %v1549, %v1677
    %v1710 = vmul.f32 %v1354, 0.2978578
    %v1711 = vmul.f32 %v1355, 0.2978578
    %v1712 = vmul.f32 %v1356, 0.2978578
    %v1713 = vmul.f32 %v1357, 0.2978578
    %v1714 = vmul.f32 %v1358, 0.2978578
    %v1715 = vmul.f32 %v1359, 0.2978578
    %v1716 = vmul.f32 %v1360, 0.2978578
    %v1717 = vmul.f32 %v1361, 0.2978578
    %v1718 = vmul.f32 %v1362, 0.2978578
    %v1719 = vmul.f32 %v1363, 0.2978578
    %v1720 = vmul.f32 %v1364, 0.2978578
    %v1721 = vmul.f32 %v1365, 0.2978578
    %1734 = vrot.lane.b32.xlu0 %v1710, 116
    %v1735 = vpop.permute.xlu0 %1734
    %1736 = vrot.lane.b32.xlu0 %v1711, 116
    %v1737 = vpop.permute.xlu0 %1736
    %1738 = vrot.lane.b32.xlu0 %v1712, 116
    %v1739 = vpop.permute.xlu0 %1738
    %1740 = vrot.lane.b32.xlu0 %v1713, 116
    %v1741 = vpop.permute.xlu0 %1740
    %1742 = vrot.lane.b32.xlu0 %v1714, 116
    %v1743 = vpop.permute.xlu0 %1742
    %1744 = vrot.lane.b32.xlu0 %v1715, 116
    %v1745 = vpop.permute.xlu0 %1744
    %1746 = vrot.lane.b32.xlu0 %v1716, 116
    %v1747 = vpop.permute.xlu0 %1746
    %1748 = vrot.lane.b32.xlu0 %v1717, 116
    %v1749 = vpop.permute.xlu0 %1748
    %1750 = vrot.lane.b32.xlu0 %v1718, 116
    %v1751 = vpop.permute.xlu0 %1750
    %1752 = vrot.lane.b32.xlu0 %v1719, 116
    %v1753 = vpop.permute.xlu0 %1752
    %1754 = vrot.lane.b32.xlu0 %v1720, 116
    %v1755 = vpop.permute.xlu0 %1754
    %1756 = vrot.lane.b32.xlu0 %v1721, 116
    %v1757 = vpop.permute.xlu0 %1756
    %v1758 = vsel %vm1179, %v1735, %v1737
    %v1759 = vsel %vm1179, %v1737, %v1739
    %v1760 = vsel %vm1179, %v1741, %v1743
    %v1761 = vsel %vm1179, %v1743, %v1745
    %v1762 = vsel %vm1179, %v1747, %v1749
    %v1763 = vsel %vm1179, %v1749, %v1751
    %v1764 = vsel %vm1179, %v1753, %v1755
    %v1765 = vsel %vm1179, %v1755, %v1757
    %v1778 = vadd.f32 %v1618, %v1758
    %v1779 = vadd.f32 %v1619, %v1759
    %v1780 = vadd.f32 %v1620, %v1739
    %v1781 = vadd.f32 %v1621, %v1760
    %v1782 = vadd.f32 %v1622, %v1761
    %v1783 = vadd.f32 %v1623, %v1745
    %v1784 = vadd.f32 %v1624, %v1762
    %v1785 = vadd.f32 %v1625, %v1763
    %v1786 = vadd.f32 %v1626, %v1751
    %v1787 = vadd.f32 %v1627, %v1764
    %v1788 = vadd.f32 %v1628, %v1765
    %v1789 = vadd.f32 %v1629, %v1757
    %v1790 = vmul.f32 %v1354, 0.8037388
    %v1791 = vmul.f32 %v1355, 0.8037388
    %v1792 = vmul.f32 %v1356, 0.8037388
    %v1793 = vmul.f32 %v1357, 0.8037388
    %v1794 = vmul.f32 %v1358, 0.8037388
    %v1795 = vmul.f32 %v1359, 0.8037388
    %v1796 = vmul.f32 %v1360, 0.8037388
    %v1797 = vmul.f32 %v1361, 0.8037388
    %v1798 = vmul.f32 %v1362, 0.8037388
    %v1799 = vmul.f32 %v1363, 0.8037388
    %v1800 = vmul.f32 %v1364, 0.8037388
    %v1801 = vmul.f32 %v1365, 0.8037388
    %1814 = vrot.lane.b32.xlu0 %v1790, 116
    %v1815 = vpop.permute.xlu0 %1814
    %1816 = vrot.lane.b32.xlu0 %v1791, 116
    %v1817 = vpop.permute.xlu0 %1816
    %1818 = vrot.lane.b32.xlu0 %v1792, 116
    %v1819 = vpop.permute.xlu0 %1818
    %1820 = vrot.lane.b32.xlu0 %v1793, 116
    %v1821 = vpop.permute.xlu0 %1820
    %1822 = vrot.lane.b32.xlu0 %v1794, 116
    %v1823 = vpop.permute.xlu0 %1822
    %1824 = vrot.lane.b32.xlu0 %v1795, 116
    %v1825 = vpop.permute.xlu0 %1824
    %1826 = vrot.lane.b32.xlu0 %v1796, 116
    %v1827 = vpop.permute.xlu0 %1826
    %1828 = vrot.lane.b32.xlu0 %v1797, 116
    %v1829 = vpop.permute.xlu0 %1828
    %1830 = vrot.lane.b32.xlu0 %v1798, 116
    %v1831 = vpop.permute.xlu0 %1830
    %1832 = vrot.lane.b32.xlu0 %v1799, 116
    %v1833 = vpop.permute.xlu0 %1832
    %1834 = vrot.lane.b32.xlu0 %v1800, 116
    %v1835 = vpop.permute.xlu0 %1834
    %1836 = vrot.lane.b32.xlu0 %v1801, 116
    %v1837 = vpop.permute.xlu0 %1836
    %v1838 = vsel %vm1179, %v1815, %v1817
    %v1839 = vsel %vm1179, %v1817, %v1819
    %v1840 = vsel %vm1179, %v1821, %v1823
    %v1841 = vsel %vm1179, %v1823, %v1825
    %v1842 = vsel %vm1179, %v1827, %v1829
    %v1843 = vsel %vm1179, %v1829, %v1831
    %v1844 = vsel %vm1179, %v1833, %v1835
    %v1845 = vsel %vm1179, %v1835, %v1837
    %v1858 = vadd.f32 %v1698, %v1838
    %v1859 = vadd.f32 %v1699, %v1839
    %v1860 = vadd.f32 %v1700, %v1819
    %v1861 = vadd.f32 %v1701, %v1840
    %v1862 = vadd.f32 %v1702, %v1841
    %v1863 = vadd.f32 %v1703, %v1825
    %v1864 = vadd.f32 %v1704, %v1842
    %v1865 = vadd.f32 %v1705, %v1843
    %v1866 = vadd.f32 %v1706, %v1831
    %v1867 = vadd.f32 %v1707, %v1844
    %v1868 = vadd.f32 %v1708, %v1845
    %v1869 = vadd.f32 %v1709, %v1837
    %v1870 = vld [vmem:[#allocation2 + $0x8] sm:$0xff]
    %v1871 = vld [vmem:[#allocation2 + $0x10] sm:$0xff]
    %v1872 = vld [vmem:[#allocation2 + $0x18] sm:$0xff]
    %v1873 = vld [vmem:[#allocation2 + $0x28] sm:$0xff]
    %v1874 = vld [vmem:[#allocation2 + $0x30] sm:$0xff]
    %v1875 = vld [vmem:[#allocation2 + $0x38] sm:$0xff]
    %v1876 = vld [vmem:[#allocation2 + $0x48] sm:$0xff]
    %v1877 = vld [vmem:[#allocation2 + $0x50] sm:$0xff]
    %v1878 = vld [vmem:[#allocation2 + $0x58] sm:$0xff]
    %v1879 = vld [vmem:[#allocation2 + $0x68] sm:$0xff]
    %v1880 = vld [vmem:[#allocation2 + $0x70] sm:$0xff]
    %v1881 = vld [vmem:[#allocation2 + $0x78] sm:$0xff]
    %v1882 = vmul.f32 %v1870, -0.8037388
    %v1883 = vmul.f32 %v1871, -0.8037388
    %v1884 = vmul.f32 %v1872, -0.8037388
    %v1885 = vmul.f32 %v1873, -0.8037388
    %v1886 = vmul.f32 %v1874, -0.8037388
    %v1887 = vmul.f32 %v1875, -0.8037388
    %v1888 = vmul.f32 %v1876, -0.8037388
    %v1889 = vmul.f32 %v1877, -0.8037388
    %v1890 = vmul.f32 %v1878, -0.8037388
    %v1891 = vmul.f32 %v1879, -0.8037388
    %v1892 = vmul.f32 %v1880, -0.8037388
    %v1893 = vmul.f32 %v1881, -0.8037388
    %1906 = vrot.lane.b32.xlu0 %v1882, 112
    %v1907 = vpop.permute.xlu0 %1906
    %1908 = vrot.lane.b32.xlu0 %v1883, 112
    %v1909 = vpop.permute.xlu0 %1908
    %1910 = vrot.lane.b32.xlu0 %v1884, 112
    %v1911 = vpop.permute.xlu0 %1910
    %1912 = vrot.lane.b32.xlu0 %v1885, 112
    %v1913 = vpop.permute.xlu0 %1912
    %1914 = vrot.lane.b32.xlu0 %v1886, 112
    %v1915 = vpop.permute.xlu0 %1914
    %1916 = vrot.lane.b32.xlu0 %v1887, 112
    %v1917 = vpop.permute.xlu0 %1916
    %1918 = vrot.lane.b32.xlu0 %v1888, 112
    %v1919 = vpop.permute.xlu0 %1918
    %1920 = vrot.lane.b32.xlu0 %v1889, 112
    %v1921 = vpop.permute.xlu0 %1920
    %1922 = vrot.lane.b32.xlu0 %v1890, 112
    %v1923 = vpop.permute.xlu0 %1922
    %1924 = vrot.lane.b32.xlu0 %v1891, 112
    %v1925 = vpop.permute.xlu0 %1924
    %1926 = vrot.lane.b32.xlu0 %v1892, 112
    %v1927 = vpop.permute.xlu0 %1926
    %1928 = vrot.lane.b32.xlu0 %v1893, 112
    %v1929 = vpop.permute.xlu0 %1928
    %vm1930 = vcmask 916480
    %v1931 = vsel %vm1930, %v1907, %v1909
    %v1932 = vsel %vm1930, %v1909, %v1911
    %v1933 = vsel %vm1930, %v1913, %v1915
    %v1934 = vsel %vm1930, %v1915, %v1917
    %v1935 = vsel %vm1930, %v1919, %v1921
    %v1936 = vsel %vm1930, %v1921, %v1923
    %v1937 = vsel %vm1930, %v1925, %v1927
    %v1938 = vsel %vm1930, %v1927, %v1929
    %v1951 = vadd.f32 %v1778, %v1907
    %v1952 = vadd.f32 %v1779, %v1931
    %v1953 = vadd.f32 %v1780, %v1932
    %v1954 = vadd.f32 %v1781, %v1913
    %v1955 = vadd.f32 %v1782, %v1933
    %v1956 = vadd.f32 %v1783, %v1934
    %v1957 = vadd.f32 %v1784, %v1919
    %v1958 = vadd.f32 %v1785, %v1935
    %v1959 = vadd.f32 %v1786, %v1936
    %v1960 = vadd.f32 %v1787, %v1925
    %v1961 = vadd.f32 %v1788, %v1937
    %v1962 = vadd.f32 %v1789, %v1938
    %v1963 = vmul.f32 %v1870, 0.2978578
    %v1964 = vmul.f32 %v1871, 0.2978578
    %v1965 = vmul.f32 %v1872, 0.2978578
    %v1966 = vmul.f32 %v1873, 0.2978578
    %v1967 = vmul.f32 %v1874, 0.2978578
    %v1968 = vmul.f32 %v1875, 0.2978578
    %v1969 = vmul.f32 %v1876, 0.2978578
    %v1970 = vmul.f32 %v1877, 0.2978578
    %v1971 = vmul.f32 %v1878, 0.2978578
    %v1972 = vmul.f32 %v1879, 0.2978578
    %v1973 = vmul.f32 %v1880, 0.2978578
    %v1974 = vmul.f32 %v1881, 0.2978578
    %1987 = vrot.lane.b32.xlu0 %v1963, 112
    %v1988 = vpop.permute.xlu0 %1987
    %1989 = vrot.lane.b32.xlu0 %v1964, 112
    %v1990 = vpop.permute.xlu0 %1989
    %1991 = vrot.lane.b32.xlu0 %v1965, 112
    %v1992 = vpop.permute.xlu0 %1991
    %1993 = vrot.lane.b32.xlu0 %v1966, 112
    %v1994 = vpop.permute.xlu0 %1993
    %1995 = vrot.lane.b32.xlu0 %v1967, 112
    %v1996 = vpop.permute.xlu0 %1995
    %1997 = vrot.lane.b32.xlu0 %v1968, 112
    %v1998 = vpop.permute.xlu0 %1997
    %1999 = vrot.lane.b32.xlu0 %v1969, 112
    %v2000 = vpop.permute.xlu0 %1999
    %2001 = vrot.lane.b32.xlu0 %v1970, 112
    %v2002 = vpop.permute.xlu0 %2001
    %2003 = vrot.lane.b32.xlu0 %v1971, 112
    %v2004 = vpop.permute.xlu0 %2003
    %2005 = vrot.lane.b32.xlu0 %v1972, 112
    %v2006 = vpop.permute.xlu0 %2005
    %2007 = vrot.lane.b32.xlu0 %v1973, 112
    %v2008 = vpop.permute.xlu0 %2007
    %2009 = vrot.lane.b32.xlu0 %v1974, 112
    %v2010 = vpop.permute.xlu0 %2009
    %v2011 = vsel %vm1930, %v1988, %v1990
    %v2012 = vsel %vm1930, %v1990, %v1992
    %v2013 = vsel %vm1930, %v1994, %v1996
    %v2014 = vsel %vm1930, %v1996, %v1998
    %v2015 = vsel %vm1930, %v2000, %v2002
    %v2016 = vsel %vm1930, %v2002, %v2004
    %v2017 = vsel %vm1930, %v2006, %v2008
    %v2018 = vsel %vm1930, %v2008, %v2010
    %v2031 = vadd.f32 %v1858, %v1988
    %v2032 = vadd.f32 %v1859, %v2011
    %v2033 = vadd.f32 %v1860, %v2012
    %v2034 = vadd.f32 %v1861, %v1994
    %v2035 = vadd.f32 %v1862, %v2013
    %v2036 = vadd.f32 %v1863, %v2014
    %v2037 = vadd.f32 %v1864, %v2000
    %v2038 = vadd.f32 %v1865, %v2015
    %v2039 = vadd.f32 %v1866, %v2016
    %v2040 = vadd.f32 %v1867, %v2006
    %v2041 = vadd.f32 %v1868, %v2017
    %v2042 = vadd.f32 %v1869, %v2018
    %v2043 = vmul.f32 %v1870, 0.49761868
    %v2044 = vmul.f32 %v1871, 0.49761868
    %v2045 = vmul.f32 %v1872, 0.49761868
    %v2046 = vmul.f32 %v1873, 0.49761868
    %v2047 = vmul.f32 %v1874, 0.49761868
    %v2048 = vmul.f32 %v1875, 0.49761868
    %v2049 = vmul.f32 %v1876, 0.49761868
    %v2050 = vmul.f32 %v1877, 0.49761868
    %v2051 = vmul.f32 %v1878, 0.49761868
    %v2052 = vmul.f32 %v1879, 0.49761868
    %v2053 = vmul.f32 %v1880, 0.49761868
    %v2054 = vmul.f32 %v1881, 0.49761868
    %2067 = vrot.lane.b32.xlu0 %v2043, 108
    %v2068 = vpop.permute.xlu0 %2067
    %2069 = vrot.lane.b32.xlu0 %v2044, 108
    %v2070 = vpop.permute.xlu0 %2069
    %2071 = vrot.lane.b32.xlu0 %v2045, 108
    %v2072 = vpop.permute.xlu0 %2071
    %2073 = vrot.lane.b32.xlu0 %v2046, 108
    %v2074 = vpop.permute.xlu0 %2073
    %2075 = vrot.lane.b32.xlu0 %v2047, 108
    %v2076 = vpop.permute.xlu0 %2075
    %2077 = vrot.lane.b32.xlu0 %v2048, 108
    %v2078 = vpop.permute.xlu0 %2077
    %2079 = vrot.lane.b32.xlu0 %v2049, 108
    %v2080 = vpop.permute.xlu0 %2079
    %2081 = vrot.lane.b32.xlu0 %v2050, 108
    %v2082 = vpop.permute.xlu0 %2081
    %2083 = vrot.lane.b32.xlu0 %v2051, 108
    %v2084 = vpop.permute.xlu0 %2083
    %2085 = vrot.lane.b32.xlu0 %v2052, 108
    %v2086 = vpop.permute.xlu0 %2085
    %2087 = vrot.lane.b32.xlu0 %v2053, 108
    %v2088 = vpop.permute.xlu0 %2087
    %2089 = vrot.lane.b32.xlu0 %v2054, 108
    %v2090 = vpop.permute.xlu0 %2089
    %vm2091 = vcmask 883712
    %v2092 = vsel %vm2091, %v2068, %v2070
    %v2093 = vsel %vm2091, %v2070, %v2072
    %v2094 = vsel %vm2091, %v2074, %v2076
    %v2095 = vsel %vm2091, %v2076, %v2078
    %v2096 = vsel %vm2091, %v2080, %v2082
    %v2097 = vsel %vm2091, %v2082, %v2084
    %v2098 = vsel %vm2091, %v2086, %v2088
    %v2099 = vsel %vm2091, %v2088, %v2090
    %v2112 = vadd.f32 %v1951, %v2068
    %v2113 = vadd.f32 %v1952, %v2092
    %v2114 = vadd.f32 %v1953, %v2093
    %v2115 = vadd.f32 %v1954, %v2074
    %v2116 = vadd.f32 %v1955, %v2094
    %v2117 = vadd.f32 %v1956, %v2095
    %v2118 = vadd.f32 %v1957, %v2080
    %v2119 = vadd.f32 %v1958, %v2096
    %v2120 = vadd.f32 %v1959, %v2097
    %v2121 = vadd.f32 %v1960, %v2086
    %v2122 = vadd.f32 %v1961, %v2098
    %v2123 = vadd.f32 %v1962, %v2099
    %v2124 = vmul.f32 %v1870, -0.099219546
    %v2125 = vmul.f32 %v1871, -0.099219546
    %v2126 = vmul.f32 %v1872, -0.099219546
    %v2127 = vmul.f32 %v1873, -0.099219546
    %v2128 = vmul.f32 %v1874, -0.099219546
    %v2129 = vmul.f32 %v1875, -0.099219546
    %v2130 = vmul.f32 %v1876, -0.099219546
    %v2131 = vmul.f32 %v1877, -0.099219546
    %v2132 = vmul.f32 %v1878, -0.099219546
    %v2133 = vmul.f32 %v1879, -0.099219546
    %v2134 = vmul.f32 %v1880, -0.099219546
    %v2135 = vmul.f32 %v1881, -0.099219546
    %2148 = vrot.lane.b32.xlu0 %v2124, 108
    %v2149 = vpop.permute.xlu0 %2148
    %2150 = vrot.lane.b32.xlu0 %v2125, 108
    %v2151 = vpop.permute.xlu0 %2150
    %2152 = vrot.lane.b32.xlu0 %v2126, 108
    %v2153 = vpop.permute.xlu0 %2152
    %2154 = vrot.lane.b32.xlu0 %v2127, 108
    %v2155 = vpop.permute.xlu0 %2154
    %2156 = vrot.lane.b32.xlu0 %v2128, 108
    %v2157 = vpop.permute.xlu0 %2156
    %2158 = vrot.lane.b32.xlu0 %v2129, 108
    %v2159 = vpop.permute.xlu0 %2158
    %2160 = vrot.lane.b32.xlu0 %v2130, 108
    %v2161 = vpop.permute.xlu0 %2160
    %2162 = vrot.lane.b32.xlu0 %v2131, 108
    %v2163 = vpop.permute.xlu0 %2162
    %2164 = vrot.lane.b32.xlu0 %v2132, 108
    %v2165 = vpop.permute.xlu0 %2164
    %2166 = vrot.lane.b32.xlu0 %v2133, 108
    %v2167 = vpop.permute.xlu0 %2166
    %2168 = vrot.lane.b32.xlu0 %v2134, 108
    %v2169 = vpop.permute.xlu0 %2168
    %2170 = vrot.lane.b32.xlu0 %v2135, 108
    %v2171 = vpop.permute.xlu0 %2170
    %v2172 = vsel %vm2091, %v2149, %v2151
    %v2173 = vsel %vm2091, %v2151, %v2153
    %v2174 = vsel %vm2091, %v2155, %v2157
    %v2175 = vsel %vm2091, %v2157, %v2159
    %v2176 = vsel %vm2091, %v2161, %v2163
    %v2177 = vsel %vm2091, %v2163, %v2165
    %v2178 = vsel %vm2091, %v2167, %v2169
    %v2179 = vsel %vm2091, %v2169, %v2171
    %v2192 = vadd.f32 %v2031, %v2149
    %v2193 = vadd.f32 %v2032, %v2172
    %v2194 = vadd.f32 %v2033, %v2173
    %v2195 = vadd.f32 %v2034, %v2155
    %v2196 = vadd.f32 %v2035, %v2174
    %v2197 = vadd.f32 %v2036, %v2175
    %v2198 = vadd.f32 %v2037, %v2161
    %v2199 = vadd.f32 %v2038, %v2176
    %v2200 = vadd.f32 %v2039, %v2177
    %v2201 = vadd.f32 %v2040, %v2167
    %v2202 = vadd.f32 %v2041, %v2178
    %v2203 = vadd.f32 %v2042, %v2179
    %v2204 = vmul.f32 %v1870, 0.029635528
    %v2205 = vmul.f32 %v1871, 0.029635528
    %v2206 = vmul.f32 %v1872, 0.029635528
    %v2207 = vmul.f32 %v1873, 0.029635528
    %v2208 = vmul.f32 %v1874, 0.029635528
    %v2209 = vmul.f32 %v1875, 0.029635528
    %v2210 = vmul.f32 %v1876, 0.029635528
    %v2211 = vmul.f32 %v1877, 0.029635528
    %v2212 = vmul.f32 %v1878, 0.029635528
    %v2213 = vmul.f32 %v1879, 0.029635528
    %v2214 = vmul.f32 %v1880, 0.029635528
    %v2215 = vmul.f32 %v1881, 0.029635528
    %2228 = vrot.lane.b32.xlu0 %v2204, 104
    %v2229 = vpop.permute.xlu0 %2228
    %2230 = vrot.lane.b32.xlu0 %v2205, 104
    %v2231 = vpop.permute.xlu0 %2230
    %2232 = vrot.lane.b32.xlu0 %v2206, 104
    %v2233 = vpop.permute.xlu0 %2232
    %2234 = vrot.lane.b32.xlu0 %v2207, 104
    %v2235 = vpop.permute.xlu0 %2234
    %2236 = vrot.lane.b32.xlu0 %v2208, 104
    %v2237 = vpop.permute.xlu0 %2236
    %2238 = vrot.lane.b32.xlu0 %v2209, 104
    %v2239 = vpop.permute.xlu0 %2238
    %2240 = vrot.lane.b32.xlu0 %v2210, 104
    %v2241 = vpop.permute.xlu0 %2240
    %2242 = vrot.lane.b32.xlu0 %v2211, 104
    %v2243 = vpop.permute.xlu0 %2242
    %2244 = vrot.lane.b32.xlu0 %v2212, 104
    %v2245 = vpop.permute.xlu0 %2244
    %2246 = vrot.lane.b32.xlu0 %v2213, 104
    %v2247 = vpop.permute.xlu0 %2246
    %2248 = vrot.lane.b32.xlu0 %v2214, 104
    %v2249 = vpop.permute.xlu0 %2248
    %2250 = vrot.lane.b32.xlu0 %v2215, 104
    %v2251 = vpop.permute.xlu0 %2250
    %vm2252 = vcmask 850944
    %v2253 = vsel %vm2252, %v2229, %v2231
    %v2254 = vsel %vm2252, %v2231, %v2233
    %v2255 = vsel %vm2252, %v2235, %v2237
    %v2256 = vsel %vm2252, %v2237, %v2239
    %v2257 = vsel %vm2252, %v2241, %v2243
    %v2258 = vsel %vm2252, %v2243, %v2245
    %v2259 = vsel %vm2252, %v2247, %v2249
    %v2260 = vsel %vm2252, %v2249, %v2251
    %v2273 = vadd.f32 %v2112, %v2229
    %v2274 = vadd.f32 %v2113, %v2253
    %v2275 = vadd.f32 %v2114, %v2254
    %v2276 = vadd.f32 %v2115, %v2235
    %v2277 = vadd.f32 %v2116, %v2255
    %v2278 = vadd.f32 %v2117, %v2256
    %v2279 = vadd.f32 %v2118, %v2241
    %v2280 = vadd.f32 %v2119, %v2257
    %v2281 = vadd.f32 %v2120, %v2258
    %v2282 = vadd.f32 %v2121, %v2247
    %v2283 = vadd.f32 %v2122, %v2259
    %v2284 = vadd.f32 %v2123, %v2260
    %v2285 = vmul.f32 %v1870, -0.012603967
    %v2286 = vmul.f32 %v1871, -0.012603967
    %v2287 = vmul.f32 %v1872, -0.012603967
    %v2288 = vmul.f32 %v1873, -0.012603967
    %v2289 = vmul.f32 %v1874, -0.012603967
    %v2290 = vmul.f32 %v1875, -0.012603967
    %v2291 = vmul.f32 %v1876, -0.012603967
    %v2292 = vmul.f32 %v1877, -0.012603967
    %v2293 = vmul.f32 %v1878, -0.012603967
    %v2294 = vmul.f32 %v1879, -0.012603967
    %v2295 = vmul.f32 %v1880, -0.012603967
    %v2296 = vmul.f32 %v1881, -0.012603967
    %2309 = vrot.lane.b32.xlu0 %v2285, 104
    %v2310 = vpop.permute.xlu0 %2309
    %2311 = vrot.lane.b32.xlu0 %v2286, 104
    %v2312 = vpop.permute.xlu0 %2311
    %2313 = vrot.lane.b32.xlu0 %v2287, 104
    %v2314 = vpop.permute.xlu0 %2313
    %2315 = vrot.lane.b32.xlu0 %v2288, 104
    %v2316 = vpop.permute.xlu0 %2315
    %2317 = vrot.lane.b32.xlu0 %v2289, 104
    %v2318 = vpop.permute.xlu0 %2317
    %2319 = vrot.lane.b32.xlu0 %v2290, 104
    %v2320 = vpop.permute.xlu0 %2319
    %2321 = vrot.lane.b32.xlu0 %v2291, 104
    %v2322 = vpop.permute.xlu0 %2321
    %2323 = vrot.lane.b32.xlu0 %v2292, 104
    %v2324 = vpop.permute.xlu0 %2323
    %2325 = vrot.lane.b32.xlu0 %v2293, 104
    %v2326 = vpop.permute.xlu0 %2325
    %2327 = vrot.lane.b32.xlu0 %v2294, 104
    %v2328 = vpop.permute.xlu0 %2327
    %2329 = vrot.lane.b32.xlu0 %v2295, 104
    %v2330 = vpop.permute.xlu0 %2329
    %2331 = vrot.lane.b32.xlu0 %v2296, 104
    %v2332 = vpop.permute.xlu0 %2331
    %v2333 = vsel %vm2252, %v2310, %v2312
    %v2334 = vsel %vm2252, %v2312, %v2314
    %v2335 = vsel %vm2252, %v2316, %v2318
    %v2336 = vsel %vm2252, %v2318, %v2320
    %v2337 = vsel %vm2252, %v2322, %v2324
    %v2338 = vsel %vm2252, %v2324, %v2326
    %v2339 = vsel %vm2252, %v2328, %v2330
    %v2340 = vsel %vm2252, %v2330, %v2332
    %v2353 = vadd.f32 %v2192, %v2310
    %v2354 = vadd.f32 %v2193, %v2333
    %v2355 = vadd.f32 %v2194, %v2334
    %v2356 = vadd.f32 %v2195, %v2316
    %v2357 = vadd.f32 %v2196, %v2335
    %v2358 = vadd.f32 %v2197, %v2336
    %v2359 = vadd.f32 %v2198, %v2322
    %v2360 = vadd.f32 %v2199, %v2337
    %v2361 = vadd.f32 %v2200, %v2338
    %v2362 = vadd.f32 %v2201, %v2328
    %v2363 = vadd.f32 %v2202, %v2339
    %v2364 = vadd.f32 %v2203, %v2340
    %v2365 = vmul.f32 %v1870, -0.075765714
    %v2366 = vmul.f32 %v1871, -0.075765714
    %v2367 = vmul.f32 %v1872, -0.075765714
    %v2368 = vmul.f32 %v1873, -0.075765714
    %v2369 = vmul.f32 %v1874, -0.075765714
    %v2370 = vmul.f32 %v1875, -0.075765714
    %v2371 = vmul.f32 %v1876, -0.075765714
    %v2372 = vmul.f32 %v1877, -0.075765714
    %v2373 = vmul.f32 %v1878, -0.075765714
    %v2374 = vmul.f32 %v1879, -0.075765714
    %v2375 = vmul.f32 %v1880, -0.075765714
    %v2376 = vmul.f32 %v1881, -0.075765714
    %2389 = vrot.lane.b32.xlu0 %v2365, 100
    %v2390 = vpop.permute.xlu0 %2389
    %2391 = vrot.lane.b32.xlu0 %v2366, 100
    %v2392 = vpop.permute.xlu0 %2391
    %2393 = vrot.lane.b32.xlu0 %v2367, 100
    %v2394 = vpop.permute.xlu0 %2393
    %2395 = vrot.lane.b32.xlu0 %v2368, 100
    %v2396 = vpop.permute.xlu0 %2395
    %2397 = vrot.lane.b32.xlu0 %v2369, 100
    %v2398 = vpop.permute.xlu0 %2397
    %2399 = vrot.lane.b32.xlu0 %v2370, 100
    %v2400 = vpop.permute.xlu0 %2399
    %2401 = vrot.lane.b32.xlu0 %v2371, 100
    %v2402 = vpop.permute.xlu0 %2401
    %2403 = vrot.lane.b32.xlu0 %v2372, 100
    %v2404 = vpop.permute.xlu0 %2403
    %2405 = vrot.lane.b32.xlu0 %v2373, 100
    %v2406 = vpop.permute.xlu0 %2405
    %2407 = vrot.lane.b32.xlu0 %v2374, 100
    %v2408 = vpop.permute.xlu0 %2407
    %2409 = vrot.lane.b32.xlu0 %v2375, 100
    %v2410 = vpop.permute.xlu0 %2409
    %2411 = vrot.lane.b32.xlu0 %v2376, 100
    %v2412 = vpop.permute.xlu0 %2411
    %vm2413 = vcmask 818176
    %v2414 = vsel %vm2413, %v2390, %v2392
    %v2415 = vsel %vm2413, %v2392, %v2394
    %v2416 = vsel %vm2413, %v2396, %v2398
    %v2417 = vsel %vm2413, %v2398, %v2400
    %v2418 = vsel %vm2413, %v2402, %v2404
    %v2419 = vsel %vm2413, %v2404, %v2406
    %v2420 = vsel %vm2413, %v2408, %v2410
    %v2421 = vsel %vm2413, %v2410, %v2412
    %v2434 = vadd.f32 %v2273, %v2390
    %v2435 = vadd.f32 %v2274, %v2414
    %v2436 = vadd.f32 %v2275, %v2415
    %v2437 = vadd.f32 %v2276, %v2396
    %v2438 = vadd.f32 %v2277, %v2416
    %v2439 = vadd.f32 %v2278, %v2417
    %v2440 = vadd.f32 %v2279, %v2402
    %v2441 = vadd.f32 %v2280, %v2418
    %v2442 = vadd.f32 %v2281, %v2419
    %v2443 = vadd.f32 %v2282, %v2408
    %v2444 = vadd.f32 %v2283, %v2420
    %v2445 = vadd.f32 %v2284, %v2421
    %v2446 = vmul.f32 %v1870, 0.0322231
    %v2447 = vmul.f32 %v1871, 0.0322231
    %v2448 = vmul.f32 %v1872, 0.0322231
    %v2449 = vmul.f32 %v1873, 0.0322231
    %v2450 = vmul.f32 %v1874, 0.0322231
    %v2451 = vmul.f32 %v1875, 0.0322231
    %v2452 = vmul.f32 %v1876, 0.0322231
    %v2453 = vmul.f32 %v1877, 0.0322231
    %v2454 = vmul.f32 %v1878, 0.0322231
    %v2455 = vmul.f32 %v1879, 0.0322231
    %v2456 = vmul.f32 %v1880, 0.0322231
    %v2457 = vmul.f32 %v1881, 0.0322231
    %2470 = vrot.lane.b32.xlu0 %v2446, 100
    %v2471 = vpop.permute.xlu0 %2470
    %2472 = vrot.lane.b32.xlu0 %v2447, 100
    %v2473 = vpop.permute.xlu0 %2472
    %2474 = vrot.lane.b32.xlu0 %v2448, 100
    %v2475 = vpop.permute.xlu0 %2474
    %2476 = vrot.lane.b32.xlu0 %v2449, 100
    %v2477 = vpop.permute.xlu0 %2476
    %2478 = vrot.lane.b32.xlu0 %v2450, 100
    %v2479 = vpop.permute.xlu0 %2478
    %2480 = vrot.lane.b32.xlu0 %v2451, 100
    %v2481 = vpop.permute.xlu0 %2480
    %2482 = vrot.lane.b32.xlu0 %v2452, 100
    %v2483 = vpop.permute.xlu0 %2482
    %2484 = vrot.lane.b32.xlu0 %v2453, 100
    %v2485 = vpop.permute.xlu0 %2484
    %2486 = vrot.lane.b32.xlu0 %v2454, 100
    %v2487 = vpop.permute.xlu0 %2486
    %2488 = vrot.lane.b32.xlu0 %v2455, 100
    %v2489 = vpop.permute.xlu0 %2488
    %2490 = vrot.lane.b32.xlu0 %v2456, 100
    %v2491 = vpop.permute.xlu0 %2490
    %2492 = vrot.lane.b32.xlu0 %v2457, 100
    %v2493 = vpop.permute.xlu0 %2492
    %v2494 = vsel %vm2413, %v2471, %v2473
    %v2495 = vsel %vm2413, %v2473, %v2475
    %v2496 = vsel %vm2413, %v2477, %v2479
    %v2497 = vsel %vm2413, %v2479, %v2481
    %v2498 = vsel %vm2413, %v2483, %v2485
    %v2499 = vsel %vm2413, %v2485, %v2487
    %v2500 = vsel %vm2413, %v2489, %v2491
    %v2501 = vsel %vm2413, %v2491, %v2493
    %v2514 = vadd.f32 %v2353, %v2471
    %v2515 = vadd.f32 %v2354, %v2494
    %v2516 = vadd.f32 %v2355, %v2495
    %v2517 = vadd.f32 %v2356, %v2477
    %v2518 = vadd.f32 %v2357, %v2496
    %v2519 = vadd.f32 %v2358, %v2497
    %v2520 = vadd.f32 %v2359, %v2483
    %v2521 = vadd.f32 %v2360, %v2498
    %v2522 = vadd.f32 %v2361, %v2499
    %v2523 = vadd.f32 %v2362, %v2489
    %v2524 = vadd.f32 %v2363, %v2500
    %v2525 = vadd.f32 %v2364, %v2501
    %2538 = vrot.lane.b32.xlu0 %v2434, 15
    %v2539 = vpop.permute.xlu0 %2538
    %2540 = vrot.lane.b32.xlu0 %v2435, 15
    %v2541 = vpop.permute.xlu0 %2540
    %2542 = vrot.lane.b32.xlu0 %v2436, 15
    %v2543 = vpop.permute.xlu0 %2542
    %2544 = vrot.lane.b32.xlu0 %v2437, 15
    %v2545 = vpop.permute.xlu0 %2544
    %2546 = vrot.lane.b32.xlu0 %v2438, 15
    %v2547 = vpop.permute.xlu0 %2546
    %2548 = vrot.lane.b32.xlu0 %v2439, 15
    %v2549 = vpop.permute.xlu0 %2548
    %2550 = vrot.lane.b32.xlu0 %v2440, 15
    %v2551 = vpop.permute.xlu0 %2550
    %2552 = vrot.lane.b32.xlu0 %v2441, 15
    %v2553 = vpop.permute.xlu0 %2552
    %2554 = vrot.lane.b32.xlu0 %v2442, 15
    %v2555 = vpop.permute.xlu0 %2554
    %2556 = vrot.lane.b32.xlu0 %v2443, 15
    %v2557 = vpop.permute.xlu0 %2556
    %2558 = vrot.lane.b32.xlu0 %v2444, 15
    %v2559 = vpop.permute.xlu0 %2558
    %2560 = vrot.lane.b32.xlu0 %v2445, 15
    %v2561 = vpop.permute.xlu0 %2560
    %vm2562 = vcmask 121856
    %v2563 = vsel %vm2562, %v2539, %v2541
    %v2564 = vsel %vm2562, %v2541, %v2543
    %v2565 = vsel %vm2562, %v2545, %v2547
    %v2566 = vsel %vm2562, %v2547, %v2549
    %v2567 = vsel %vm2562, %v2551, %v2553
    %v2568 = vsel %vm2562, %v2553, %v2555
    %v2569 = vsel %vm2562, %v2557, %v2559
    %v2570 = vsel %vm2562, %v2559, %v2561
    %2579 = vst [vmem:[#allocation6] sm:$0xff] %v2563
    %2580 = vst [vmem:[#allocation6 + $0x8] sm:$0xff] %v2564
    %2581 = vst [vmem:[#allocation6 + $0x20] sm:$0xff] %v2565
    %2582 = vst [vmem:[#allocation6 + $0x28] sm:$0xff] %v2566
    %2583 = vst [vmem:[#allocation6 + $0x40] sm:$0xff] %v2567
    %2584 = vst [vmem:[#allocation6 + $0x48] sm:$0xff] %v2568
    %2585 = vst [vmem:[#allocation6 + $0x60] sm:$0xff] %v2569
    %2586 = vst [vmem:[#allocation6 + $0x68] sm:$0xff] %v2570
    %2599 = vrot.lane.b32.xlu0 %v2514, 15
    %v2600 = vpop.permute.xlu0 %2599
    %2601 = vrot.lane.b32.xlu0 %v2515, 15
    %v2602 = vpop.permute.xlu0 %2601
    %2603 = vrot.lane.b32.xlu0 %v2516, 15
    %v2604 = vpop.permute.xlu0 %2603
    %2605 = vrot.lane.b32.xlu0 %v2517, 15
    %v2606 = vpop.permute.xlu0 %2605
    %2607 = vrot.lane.b32.xlu0 %v2518, 15
    %v2608 = vpop.permute.xlu0 %2607
    %2609 = vrot.lane.b32.xlu0 %v2519, 15
    %v2610 = vpop.permute.xlu0 %2609
    %2611 = vrot.lane.b32.xlu0 %v2520, 15
    %v2612 = vpop.permute.xlu0 %2611
    %2613 = vrot.lane.b32.xlu0 %v2521, 15
    %v2614 = vpop.permute.xlu0 %2613
    %2615 = vrot.lane.b32.xlu0 %v2522, 15
    %v2616 = vpop.permute.xlu0 %2615
    %2617 = vrot.lane.b32.xlu0 %v2523, 15
    %v2618 = vpop.permute.xlu0 %2617
    %2619 = vrot.lane.b32.xlu0 %v2524, 15
    %v2620 = vpop.permute.xlu0 %2619
    %2621 = vrot.lane.b32.xlu0 %v2525, 15
    %v2622 = vpop.permute.xlu0 %2621
    %v2623 = vsel %vm2562, %v2600, %v2602
    %v2624 = vsel %vm2562, %v2602, %v2604
    %v2625 = vsel %vm2562, %v2606, %v2608
    %v2626 = vsel %vm2562, %v2608, %v2610
    %v2627 = vsel %vm2562, %v2612, %v2614
    %v2628 = vsel %vm2562, %v2614, %v2616
    %v2629 = vsel %vm2562, %v2618, %v2620
    %v2630 = vsel %vm2562, %v2620, %v2622
    %2639 = vst [vmem:[#allocation2 + $0x8] sm:$0xff] %v2623
    %2640 = vst [vmem:[#allocation2 + $0x10] sm:$0xff] %v2624
    %2641 = vst [vmem:[#allocation2 + $0x28] sm:$0xff] %v2625
    %2642 = vst [vmem:[#allocation2 + $0x30] sm:$0xff] %v2626
    %2643 = vst [vmem:[#allocation2 + $0x48] sm:$0xff] %v2627
    %2644 = vst [vmem:[#allocation2 + $0x50] sm:$0xff] %v2628
    %2645 = vst [vmem:[#allocation2 + $0x68] sm:$0xff] %v2629
    %2646 = vst [vmem:[#allocation2 + $0x70] sm:$0xff] %v2630
    %v2647 = vld [vmem:[#allocation2] sm:$0xff]
    %v2648 = vld [vmem:[#allocation2 + $0x8] sm:$0xff]
    %v2649 = vld [vmem:[#allocation2 + $0x10] sm:$0xff]
    %v2650 = vld [vmem:[#allocation2 + $0x20] sm:$0xff]
    %v2651 = vld [vmem:[#allocation2 + $0x28] sm:$0xff]
    %v2652 = vld [vmem:[#allocation2 + $0x30] sm:$0xff]
    %v2653 = vld [vmem:[#allocation2 + $0x40] sm:$0xff]
    %v2654 = vld [vmem:[#allocation2 + $0x48] sm:$0xff]
    %v2655 = vld [vmem:[#allocation2 + $0x50] sm:$0xff]
    %v2656 = vld [vmem:[#allocation2 + $0x60] sm:$0xff]
    %v2657 = vld [vmem:[#allocation2 + $0x68] sm:$0xff]
    %v2658 = vld [vmem:[#allocation2 + $0x70] sm:$0xff]
    %v2659 = vmul.f32 %v2647, -0.0322231
    %v2660 = vmul.f32 %v2648, -0.0322231
    %v2661 = vmul.f32 %v2649, -0.0322231
    %v2662 = vmul.f32 %v2650, -0.0322231
    %v2663 = vmul.f32 %v2651, -0.0322231
    %v2664 = vmul.f32 %v2652, -0.0322231
    %v2665 = vmul.f32 %v2653, -0.0322231
    %v2666 = vmul.f32 %v2654, -0.0322231
    %v2667 = vmul.f32 %v2655, -0.0322231
    %v2668 = vmul.f32 %v2656, -0.0322231
    %v2669 = vmul.f32 %v2657, -0.0322231
    %v2670 = vmul.f32 %v2658, -0.0322231
    %v2671 = vmul.f32 %v2647, -0.012603967
    %v2672 = vmul.f32 %v2648, -0.012603967
    %v2673 = vmul.f32 %v2649, -0.012603967
    %v2674 = vmul.f32 %v2650, -0.012603967
    %v2675 = vmul.f32 %v2651, -0.012603967
    %v2676 = vmul.f32 %v2652, -0.012603967
    %v2677 = vmul.f32 %v2653, -0.012603967
    %v2678 = vmul.f32 %v2654, -0.012603967
    %v2679 = vmul.f32 %v2655, -0.012603967
    %v2680 = vmul.f32 %v2656, -0.012603967
    %v2681 = vmul.f32 %v2657, -0.012603967
    %v2682 = vmul.f32 %v2658, -0.012603967
    %2695 = vrot.lane.b32.xlu0 %v2671, 120
    %v2696 = vpop.permute.xlu0 %2695
    %2697 = vrot.lane.b32.xlu0 %v2672, 120
    %v2698 = vpop.permute.xlu0 %2697
    %2699 = vrot.lane.b32.xlu0 %v2673, 120
    %v2700 = vpop.permute.xlu0 %2699
    %2701 = vrot.lane.b32.xlu0 %v2674, 120
    %v2702 = vpop.permute.xlu0 %2701
    %2703 = vrot.lane.b32.xlu0 %v2675, 120
    %v2704 = vpop.permute.xlu0 %2703
    %2705 = vrot.lane.b32.xlu0 %v2676, 120
    %v2706 = vpop.permute.xlu0 %2705
    %2707 = vrot.lane.b32.xlu0 %v2677, 120
    %v2708 = vpop.permute.xlu0 %2707
    %2709 = vrot.lane.b32.xlu0 %v2678, 120
    %v2710 = vpop.permute.xlu0 %2709
    %2711 = vrot.lane.b32.xlu0 %v2679, 120
    %v2712 = vpop.permute.xlu0 %2711
    %2713 = vrot.lane.b32.xlu0 %v2680, 120
    %v2714 = vpop.permute.xlu0 %2713
    %2715 = vrot.lane.b32.xlu0 %v2681, 120
    %v2716 = vpop.permute.xlu0 %2715
    %2717 = vrot.lane.b32.xlu0 %v2682, 120
    %v2718 = vpop.permute.xlu0 %2717
    %v2719 = vsel %vm1017, %v2696, %v2698
    %v2720 = vsel %vm1017, %v2698, %v2700
    %v2721 = vsel %vm1017, %v2702, %v2704
    %v2722 = vsel %vm1017, %v2704, %v2706
    %v2723 = vsel %vm1017, %v2708, %v2710
    %v2724 = vsel %vm1017, %v2710, %v2712
    %v2725 = vsel %vm1017, %v2714, %v2716
    %v2726 = vsel %vm1017, %v2716, %v2718
    %v2739 = vadd.f32 %v2659, %v2719
    %v2740 = vadd.f32 %v2660, %v2720
    %v2741 = vadd.f32 %v2661, %v2700
    %v2742 = vadd.f32 %v2662, %v2721
    %v2743 = vadd.f32 %v2663, %v2722
    %v2744 = vadd.f32 %v2664, %v2706
    %v2745 = vadd.f32 %v2665, %v2723
    %v2746 = vadd.f32 %v2666, %v2724
    %v2747 = vadd.f32 %v2667, %v2712
    %v2748 = vadd.f32 %v2668, %v2725
    %v2749 = vadd.f32 %v2669, %v2726
    %v2750 = vadd.f32 %v2670, %v2718
    %v2751 = vmul.f32 %v2647, 0.099219546
    %v2752 = vmul.f32 %v2648, 0.099219546
    %v2753 = vmul.f32 %v2649, 0.099219546
    %v2754 = vmul.f32 %v2650, 0.099219546
    %v2755 = vmul.f32 %v2651, 0.099219546
    %v2756 = vmul.f32 %v2652, 0.099219546
    %v2757 = vmul.f32 %v2653, 0.099219546
    %v2758 = vmul.f32 %v2654, 0.099219546
    %v2759 = vmul.f32 %v2655, 0.099219546
    %v2760 = vmul.f32 %v2656, 0.099219546
    %v2761 = vmul.f32 %v2657, 0.099219546
    %v2762 = vmul.f32 %v2658, 0.099219546
    %2775 = vrot.lane.b32.xlu0 %v2751, 112
    %v2776 = vpop.permute.xlu0 %2775
    %2777 = vrot.lane.b32.xlu0 %v2752, 112
    %v2778 = vpop.permute.xlu0 %2777
    %2779 = vrot.lane.b32.xlu0 %v2753, 112
    %v2780 = vpop.permute.xlu0 %2779
    %2781 = vrot.lane.b32.xlu0 %v2754, 112
    %v2782 = vpop.permute.xlu0 %2781
    %2783 = vrot.lane.b32.xlu0 %v2755, 112
    %v2784 = vpop.permute.xlu0 %2783
    %2785 = vrot.lane.b32.xlu0 %v2756, 112
    %v2786 = vpop.permute.xlu0 %2785
    %2787 = vrot.lane.b32.xlu0 %v2757, 112
    %v2788 = vpop.permute.xlu0 %2787
    %2789 = vrot.lane.b32.xlu0 %v2758, 112
    %v2790 = vpop.permute.xlu0 %2789
    %2791 = vrot.lane.b32.xlu0 %v2759, 112
    %v2792 = vpop.permute.xlu0 %2791
    %2793 = vrot.lane.b32.xlu0 %v2760, 112
    %v2794 = vpop.permute.xlu0 %2793
    %2795 = vrot.lane.b32.xlu0 %v2761, 112
    %v2796 = vpop.permute.xlu0 %2795
    %2797 = vrot.lane.b32.xlu0 %v2762, 112
    %v2798 = vpop.permute.xlu0 %2797
    %v2799 = vsel %vm1930, %v2776, %v2778
    %v2800 = vsel %vm1930, %v2778, %v2780
    %v2801 = vsel %vm1930, %v2782, %v2784
    %v2802 = vsel %vm1930, %v2784, %v2786
    %v2803 = vsel %vm1930, %v2788, %v2790
    %v2804 = vsel %vm1930, %v2790, %v2792
    %v2805 = vsel %vm1930, %v2794, %v2796
    %v2806 = vsel %vm1930, %v2796, %v2798
    %v2819 = vadd.f32 %v2739, %v2799
    %v2820 = vadd.f32 %v2740, %v2800
    %v2821 = vadd.f32 %v2741, %v2780
    %v2822 = vadd.f32 %v2742, %v2801
    %v2823 = vadd.f32 %v2743, %v2802
    %v2824 = vadd.f32 %v2744, %v2786
    %v2825 = vadd.f32 %v2745, %v2803
    %v2826 = vadd.f32 %v2746, %v2804
    %v2827 = vadd.f32 %v2747, %v2792
    %v2828 = vadd.f32 %v2748, %v2805
    %v2829 = vadd.f32 %v2749, %v2806
    %v2830 = vadd.f32 %v2750, %v2798
    %v2831 = vmul.f32 %v2647, 0.2978578
    %v2832 = vmul.f32 %v2648, 0.2978578
    %v2833 = vmul.f32 %v2649, 0.2978578
    %v2834 = vmul.f32 %v2650, 0.2978578
    %v2835 = vmul.f32 %v2651, 0.2978578
    %v2836 = vmul.f32 %v2652, 0.2978578
    %v2837 = vmul.f32 %v2653, 0.2978578
    %v2838 = vmul.f32 %v2654, 0.2978578
    %v2839 = vmul.f32 %v2655, 0.2978578
    %v2840 = vmul.f32 %v2656, 0.2978578
    %v2841 = vmul.f32 %v2657, 0.2978578
    %v2842 = vmul.f32 %v2658, 0.2978578
    %2855 = vrot.lane.b32.xlu0 %v2831, 104
    %v2856 = vpop.permute.xlu0 %2855
    %2857 = vrot.lane.b32.xlu0 %v2832, 104
    %v2858 = vpop.permute.xlu0 %2857
    %2859 = vrot.lane.b32.xlu0 %v2833, 104
    %v2860 = vpop.permute.xlu0 %2859
    %2861 = vrot.lane.b32.xlu0 %v2834, 104
    %v2862 = vpop.permute.xlu0 %2861
    %2863 = vrot.lane.b32.xlu0 %v2835, 104
    %v2864 = vpop.permute.xlu0 %2863
    %2865 = vrot.lane.b32.xlu0 %v2836, 104
    %v2866 = vpop.permute.xlu0 %2865
    %2867 = vrot.lane.b32.xlu0 %v2837, 104
    %v2868 = vpop.permute.xlu0 %2867
    %2869 = vrot.lane.b32.xlu0 %v2838, 104
    %v2870 = vpop.permute.xlu0 %2869
    %2871 = vrot.lane.b32.xlu0 %v2839, 104
    %v2872 = vpop.permute.xlu0 %2871
    %2873 = vrot.lane.b32.xlu0 %v2840, 104
    %v2874 = vpop.permute.xlu0 %2873
    %2875 = vrot.lane.b32.xlu0 %v2841, 104
    %v2876 = vpop.permute.xlu0 %2875
    %2877 = vrot.lane.b32.xlu0 %v2842, 104
    %v2878 = vpop.permute.xlu0 %2877
    %v2879 = vsel %vm2252, %v2856, %v2858
    %v2880 = vsel %vm2252, %v2858, %v2860
    %v2881 = vsel %vm2252, %v2862, %v2864
    %v2882 = vsel %vm2252, %v2864, %v2866
    %v2883 = vsel %vm2252, %v2868, %v2870
    %v2884 = vsel %vm2252, %v2870, %v2872
    %v2885 = vsel %vm2252, %v2874, %v2876
    %v2886 = vsel %vm2252, %v2876, %v2878
    %v2899 = vadd.f32 %v2819, %v2879
    %v2900 = vadd.f32 %v2820, %v2880
    %v2901 = vadd.f32 %v2821, %v2860
    %v2902 = vadd.f32 %v2822, %v2881
    %v2903 = vadd.f32 %v2823, %v2882
    %v2904 = vadd.f32 %v2824, %v2866
    %v2905 = vadd.f32 %v2825, %v2883
    %v2906 = vadd.f32 %v2826, %v2884
    %v2907 = vadd.f32 %v2827, %v2872
    %v2908 = vadd.f32 %v2828, %v2885
    %v2909 = vadd.f32 %v2829, %v2886
    %v2910 = vadd.f32 %v2830, %v2878
    %v2911 = vld [vmem:[#allocation2 + $0x8] sm:$0xff]
    %v2912 = vld [vmem:[#allocation2 + $0x10] sm:$0xff]
    %v2913 = vld [vmem:[#allocation2 + $0x18] sm:$0xff]
    %v2914 = vld [vmem:[#allocation2 + $0x28] sm:$0xff]
    %v2915 = vld [vmem:[#allocation2 + $0x30] sm:$0xff]
    %v2916 = vld [vmem:[#allocation2 + $0x38] sm:$0xff]
    %v2917 = vld [vmem:[#allocation2 + $0x48] sm:$0xff]
    %v2918 = vld [vmem:[#allocation2 + $0x50] sm:$0xff]
    %v2919 = vld [vmem:[#allocation2 + $0x58] sm:$0xff]
    %v2920 = vld [vmem:[#allocation2 + $0x68] sm:$0xff]
    %v2921 = vld [vmem:[#allocation2 + $0x70] sm:$0xff]
    %v2922 = vld [vmem:[#allocation2 + $0x78] sm:$0xff]
    %v2923 = vmul.f32 %v2911, -0.8037388
    %v2924 = vmul.f32 %v2912, -0.8037388
    %v2925 = vmul.f32 %v2913, -0.8037388
    %v2926 = vmul.f32 %v2914, -0.8037388
    %v2927 = vmul.f32 %v2915, -0.8037388
    %v2928 = vmul.f32 %v2916, -0.8037388
    %v2929 = vmul.f32 %v2917, -0.8037388
    %v2930 = vmul.f32 %v2918, -0.8037388
    %v2931 = vmul.f32 %v2919, -0.8037388
    %v2932 = vmul.f32 %v2920, -0.8037388
    %v2933 = vmul.f32 %v2921, -0.8037388
    %v2934 = vmul.f32 %v2922, -0.8037388
    %2947 = vrot.lane.b32.xlu0 %v2923, 96
    %v2948 = vpop.permute.xlu0 %2947
    %2949 = vrot.lane.b32.xlu0 %v2924, 96
    %v2950 = vpop.permute.xlu0 %2949
    %2951 = vrot.lane.b32.xlu0 %v2925, 96
    %v2952 = vpop.permute.xlu0 %2951
    %2953 = vrot.lane.b32.xlu0 %v2926, 96
    %v2954 = vpop.permute.xlu0 %2953
    %2955 = vrot.lane.b32.xlu0 %v2927, 96
    %v2956 = vpop.permute.xlu0 %2955
    %2957 = vrot.lane.b32.xlu0 %v2928, 96
    %v2958 = vpop.permute.xlu0 %2957
    %2959 = vrot.lane.b32.xlu0 %v2929, 96
    %v2960 = vpop.permute.xlu0 %2959
    %2961 = vrot.lane.b32.xlu0 %v2930, 96
    %v2962 = vpop.permute.xlu0 %2961
    %2963 = vrot.lane.b32.xlu0 %v2931, 96
    %v2964 = vpop.permute.xlu0 %2963
    %2965 = vrot.lane.b32.xlu0 %v2932, 96
    %v2966 = vpop.permute.xlu0 %2965
    %2967 = vrot.lane.b32.xlu0 %v2933, 96
    %v2968 = vpop.permute.xlu0 %2967
    %2969 = vrot.lane.b32.xlu0 %v2934, 96
    %v2970 = vpop.permute.xlu0 %2969
    %vm2971 = vcmask 785408
    %v2972 = vsel %vm2971, %v2948, %v2950
    %v2973 = vsel %vm2971, %v2950, %v2952
    %v2974 = vsel %vm2971, %v2954, %v2956
    %v2975 = vsel %vm2971, %v2956, %v2958
    %v2976 = vsel %vm2971, %v2960, %v2962
    %v2977 = vsel %vm2971, %v2962, %v2964
    %v2978 = vsel %vm2971, %v2966, %v2968
    %v2979 = vsel %vm2971, %v2968, %v2970
    %v2992 = vadd.f32 %v2899, %v2948
    %v2993 = vadd.f32 %v2900, %v2972
    %v2994 = vadd.f32 %v2901, %v2973
    %v2995 = vadd.f32 %v2902, %v2954
    %v2996 = vadd.f32 %v2903, %v2974
    %v2997 = vadd.f32 %v2904, %v2975
    %v2998 = vadd.f32 %v2905, %v2960
    %v2999 = vadd.f32 %v2906, %v2976
    %v3000 = vadd.f32 %v2907, %v2977
    %v3001 = vadd.f32 %v2908, %v2966
    %v3002 = vadd.f32 %v2909, %v2978
    %v3003 = vadd.f32 %v2910, %v2979
    %v3004 = vmul.f32 %v2911, 0.49761868
    %v3005 = vmul.f32 %v2912, 0.49761868
    %v3006 = vmul.f32 %v2913, 0.49761868
    %v3007 = vmul.f32 %v2914, 0.49761868
    %v3008 = vmul.f32 %v2915, 0.49761868
    %v3009 = vmul.f32 %v2916, 0.49761868
    %v3010 = vmul.f32 %v2917, 0.49761868
    %v3011 = vmul.f32 %v2918, 0.49761868
    %v3012 = vmul.f32 %v2919, 0.49761868
    %v3013 = vmul.f32 %v2920, 0.49761868
    %v3014 = vmul.f32 %v2921, 0.49761868
    %v3015 = vmul.f32 %v2922, 0.49761868
    %3028 = vrot.lane.b32.xlu0 %v3004, 88
    %v3029 = vpop.permute.xlu0 %3028
    %3030 = vrot.lane.b32.xlu0 %v3005, 88
    %v3031 = vpop.permute.xlu0 %3030
    %3032 = vrot.lane.b32.xlu0 %v3006, 88
    %v3033 = vpop.permute.xlu0 %3032
    %3034 = vrot.lane.b32.xlu0 %v3007, 88
    %v3035 = vpop.permute.xlu0 %3034
    %3036 = vrot.lane.b32.xlu0 %v3008, 88
    %v3037 = vpop.permute.xlu0 %3036
    %3038 = vrot.lane.b32.xlu0 %v3009, 88
    %v3039 = vpop.permute.xlu0 %3038
    %3040 = vrot.lane.b32.xlu0 %v3010, 88
    %v3041 = vpop.permute.xlu0 %3040
    %3042 = vrot.lane.b32.xlu0 %v3011, 88
    %v3043 = vpop.permute.xlu0 %3042
    %3044 = vrot.lane.b32.xlu0 %v3012, 88
    %v3045 = vpop.permute.xlu0 %3044
    %3046 = vrot.lane.b32.xlu0 %v3013, 88
    %v3047 = vpop.permute.xlu0 %3046
    %3048 = vrot.lane.b32.xlu0 %v3014, 88
    %v3049 = vpop.permute.xlu0 %3048
    %3050 = vrot.lane.b32.xlu0 %v3015, 88
    %v3051 = vpop.permute.xlu0 %3050
    %vm3052 = vcmask 719872
    %v3053 = vsel %vm3052, %v3029, %v3031
    %v3054 = vsel %vm3052, %v3031, %v3033
    %v3055 = vsel %vm3052, %v3035, %v3037
    %v3056 = vsel %vm3052, %v3037, %v3039
    %v3057 = vsel %vm3052, %v3041, %v3043
    %v3058 = vsel %vm3052, %v3043, %v3045
    %v3059 = vsel %vm3052, %v3047, %v3049
    %v3060 = vsel %vm3052, %v3049, %v3051
    %v3073 = vadd.f32 %v2992, %v3029
    %v3074 = vadd.f32 %v2993, %v3053
    %v3075 = vadd.f32 %v2994, %v3054
    %v3076 = vadd.f32 %v2995, %v3035
    %v3077 = vadd.f32 %v2996, %v3055
    %v3078 = vadd.f32 %v2997, %v3056
    %v3079 = vadd.f32 %v2998, %v3041
    %v3080 = vadd.f32 %v2999, %v3057
    %v3081 = vadd.f32 %v3000, %v3058
    %v3082 = vadd.f32 %v3001, %v3047
    %v3083 = vadd.f32 %v3002, %v3059
    %v3084 = vadd.f32 %v3003, %v3060
    %v3085 = vmul.f32 %v2911, 0.029635528
    %v3086 = vmul.f32 %v2912, 0.029635528
    %v3087 = vmul.f32 %v2913, 0.029635528
    %v3088 = vmul.f32 %v2914, 0.029635528
    %v3089 = vmul.f32 %v2915, 0.029635528
    %v3090 = vmul.f32 %v2916, 0.029635528
    %v3091 = vmul.f32 %v2917, 0.029635528
    %v3092 = vmul.f32 %v2918, 0.029635528
    %v3093 = vmul.f32 %v2919, 0.029635528
    %v3094 = vmul.f32 %v2920, 0.029635528
    %v3095 = vmul.f32 %v2921, 0.029635528
    %v3096 = vmul.f32 %v2922, 0.029635528
    %3109 = vrot.lane.b32.xlu0 %v3085, 80
    %v3110 = vpop.permute.xlu0 %3109
    %3111 = vrot.lane.b32.xlu0 %v3086, 80
    %v3112 = vpop.permute.xlu0 %3111
    %3113 = vrot.lane.b32.xlu0 %v3087, 80
    %v3114 = vpop.permute.xlu0 %3113
    %3115 = vrot.lane.b32.xlu0 %v3088, 80
    %v3116 = vpop.permute.xlu0 %3115
    %3117 = vrot.lane.b32.xlu0 %v3089, 80
    %v3118 = vpop.permute.xlu0 %3117
    %3119 = vrot.lane.b32.xlu0 %v3090, 80
    %v3120 = vpop.permute.xlu0 %3119
    %3121 = vrot.lane.b32.xlu0 %v3091, 80
    %v3122 = vpop.permute.xlu0 %3121
    %3123 = vrot.lane.b32.xlu0 %v3092, 80
    %v3124 = vpop.permute.xlu0 %3123
    %3125 = vrot.lane.b32.xlu0 %v3093, 80
    %v3126 = vpop.permute.xlu0 %3125
    %3127 = vrot.lane.b32.xlu0 %v3094, 80
    %v3128 = vpop.permute.xlu0 %3127
    %3129 = vrot.lane.b32.xlu0 %v3095, 80
    %v3130 = vpop.permute.xlu0 %3129
    %3131 = vrot.lane.b32.xlu0 %v3096, 80
    %v3132 = vpop.permute.xlu0 %3131
    %vm3133 = vcmask 654336
    %v3134 = vsel %vm3133, %v3110, %v3112
    %v3135 = vsel %vm3133, %v3112, %v3114
    %v3136 = vsel %vm3133, %v3116, %v3118
    %v3137 = vsel %vm3133, %v3118, %v3120
    %v3138 = vsel %vm3133, %v3122, %v3124
    %v3139 = vsel %vm3133, %v3124, %v3126
    %v3140 = vsel %vm3133, %v3128, %v3130
    %v3141 = vsel %vm3133, %v3130, %v3132
    %v3154 = vadd.f32 %v3073, %v3110
    %v3155 = vadd.f32 %v3074, %v3134
    %v3156 = vadd.f32 %v3075, %v3135
    %v3157 = vadd.f32 %v3076, %v3116
    %v3158 = vadd.f32 %v3077, %v3136
    %v3159 = vadd.f32 %v3078, %v3137
    %v3160 = vadd.f32 %v3079, %v3122
    %v3161 = vadd.f32 %v3080, %v3138
    %v3162 = vadd.f32 %v3081, %v3139
    %v3163 = vadd.f32 %v3082, %v3128
    %v3164 = vadd.f32 %v3083, %v3140
    %v3165 = vadd.f32 %v3084, %v3141
    %v3166 = vmul.f32 %v2911, -0.075765714
    %v3167 = vmul.f32 %v2912, -0.075765714
    %v3168 = vmul.f32 %v2913, -0.075765714
    %v3169 = vmul.f32 %v2914, -0.075765714
    %v3170 = vmul.f32 %v2915, -0.075765714
    %v3171 = vmul.f32 %v2916, -0.075765714
    %v3172 = vmul.f32 %v2917, -0.075765714
    %v3173 = vmul.f32 %v2918, -0.075765714
    %v3174 = vmul.f32 %v2919, -0.075765714
    %v3175 = vmul.f32 %v2920, -0.075765714
    %v3176 = vmul.f32 %v2921, -0.075765714
    %v3177 = vmul.f32 %v2922, -0.075765714
    %3190 = vrot.lane.b32.xlu0 %v3166, 72
    %v3191 = vpop.permute.xlu0 %3190
    %3192 = vrot.lane.b32.xlu0 %v3167, 72
    %v3193 = vpop.permute.xlu0 %3192
    %3194 = vrot.lane.b32.xlu0 %v3168, 72
    %v3195 = vpop.permute.xlu0 %3194
    %3196 = vrot.lane.b32.xlu0 %v3169, 72
    %v3197 = vpop.permute.xlu0 %3196
    %3198 = vrot.lane.b32.xlu0 %v3170, 72
    %v3199 = vpop.permute.xlu0 %3198
    %3200 = vrot.lane.b32.xlu0 %v3171, 72
    %v3201 = vpop.permute.xlu0 %3200
    %3202 = vrot.lane.b32.xlu0 %v3172, 72
    %v3203 = vpop.permute.xlu0 %3202
    %3204 = vrot.lane.b32.xlu0 %v3173, 72
    %v3205 = vpop.permute.xlu0 %3204
    %3206 = vrot.lane.b32.xlu0 %v3174, 72
    %v3207 = vpop.permute.xlu0 %3206
    %3208 = vrot.lane.b32.xlu0 %v3175, 72
    %v3209 = vpop.permute.xlu0 %3208
    %3210 = vrot.lane.b32.xlu0 %v3176, 72
    %v3211 = vpop.permute.xlu0 %3210
    %3212 = vrot.lane.b32.xlu0 %v3177, 72
    %v3213 = vpop.permute.xlu0 %3212
    %vm3214 = vcmask 588800
    %v3215 = vsel %vm3214, %v3191, %v3193
    %v3216 = vsel %vm3214, %v3193, %v3195
    %v3217 = vsel %vm3214, %v3197, %v3199
    %v3218 = vsel %vm3214, %v3199, %v3201
    %v3219 = vsel %vm3214, %v3203, %v3205
    %v3220 = vsel %vm3214, %v3205, %v3207
    %v3221 = vsel %vm3214, %v3209, %v3211
    %v3222 = vsel %vm3214, %v3211, %v3213
    %v3235 = vadd.f32 %v3154, %v3191
    %v3236 = vadd.f32 %v3155, %v3215
    %v3237 = vadd.f32 %v3156, %v3216
    %v3238 = vadd.f32 %v3157, %v3197
    %v3239 = vadd.f32 %v3158, %v3217
    %v3240 = vadd.f32 %v3159, %v3218
    %v3241 = vadd.f32 %v3160, %v3203
    %v3242 = vadd.f32 %v3161, %v3219
    %v3243 = vadd.f32 %v3162, %v3220
    %v3244 = vadd.f32 %v3163, %v3209
    %v3245 = vadd.f32 %v3164, %v3221
    %v3246 = vadd.f32 %v3165, %v3222
    %3259 = vrot.lane.b32.xlu0 %v3235, 31
    %v3260 = vpop.permute.xlu0 %3259
    %3261 = vrot.lane.b32.xlu0 %v3236, 31
    %v3262 = vpop.permute.xlu0 %3261
    %3263 = vrot.lane.b32.xlu0 %v3237, 31
    %v3264 = vpop.permute.xlu0 %3263
    %3265 = vrot.lane.b32.xlu0 %v3238, 31
    %v3266 = vpop.permute.xlu0 %3265
    %3267 = vrot.lane.b32.xlu0 %v3239, 31
    %v3268 = vpop.permute.xlu0 %3267
    %3269 = vrot.lane.b32.xlu0 %v3240, 31
    %v3270 = vpop.permute.xlu0 %3269
    %3271 = vrot.lane.b32.xlu0 %v3241, 31
    %v3272 = vpop.permute.xlu0 %3271
    %3273 = vrot.lane.b32.xlu0 %v3242, 31
    %v3274 = vpop.permute.xlu0 %3273
    %3275 = vrot.lane.b32.xlu0 %v3243, 31
    %v3276 = vpop.permute.xlu0 %3275
    %3277 = vrot.lane.b32.xlu0 %v3244, 31
    %v3278 = vpop.permute.xlu0 %3277
    %3279 = vrot.lane.b32.xlu0 %v3245, 31
    %v3280 = vpop.permute.xlu0 %3279
    %3281 = vrot.lane.b32.xlu0 %v3246, 31
    %v3282 = vpop.permute.xlu0 %3281
    %vm3283 = vcmask 252928
    %v3284 = vsel %vm3283, %v3260, %v3262
    %v3285 = vsel %vm3283, %v3262, %v3264
    %v3286 = vsel %vm3283, %v3266, %v3268
    %v3287 = vsel %vm3283, %v3268, %v3270
    %v3288 = vsel %vm3283, %v3272, %v3274
    %v3289 = vsel %vm3283, %v3274, %v3276
    %v3290 = vsel %vm3283, %v3278, %v3280
    %v3291 = vsel %vm3283, %v3280, %v3282
    %3300 = vst [vmem:[#allocation6 + $0x10] sm:$0xff] %v3284
    %3301 = vst [vmem:[#allocation6 + $0x18] sm:$0xff] %v3285
    %3302 = vst [vmem:[#allocation6 + $0x30] sm:$0xff] %v3286
    %3303 = vst [vmem:[#allocation6 + $0x38] sm:$0xff] %v3287
    %3304 = vst [vmem:[#allocation6 + $0x50] sm:$0xff] %v3288
    %3305 = vst [vmem:[#allocation6 + $0x58] sm:$0xff] %v3289
    %3306 = vst [vmem:[#allocation6 + $0x70] sm:$0xff] %v3290
    %3307 = vst [vmem:[#allocation6 + $0x78] sm:$0xff] %v3291
    // Predicated region
    $region10: #{tpu_custom_call.1} parent=1 // pred_check
      _
    $region11: #{tpu_custom_call.1} parent=1 // pred_check_branch
      %3309 = sbr.rel (0) target = $region13
    $region12: #{tpu_custom_call.1} parent=1 // pred_region
      %3311 = vsyncadd [#allocation5], 0
      %s3312 = sshll.u32 [#allocation6], 4
      %s3313 = int_to_ptr.vmem [resolvable:$true] %s3312
      %s3314 = sshll.u32 %s1, 4
      %s3315 = int_to_ptr.hbm [resolvable:$true] %s3314
      %3320 = dma.vmem_to_hbm [thread:$0]  %s3313, 2048, %s3315, [#allocation5], 512, 512, 32
    $region13: #{tpu_custom_call.1} parent=1 // pred_fallthru
      _
    // Predicated region
    $region14: #{tpu_custom_call.1} parent=1 // pred_check
      _
    $region15: #{tpu_custom_call.1} parent=1 // pred_check_branch
      %3322 = sbr.rel (0) target = $region17
    $region16: #{tpu_custom_call.1} parent=1 // pred_region
      %3324 = dma.done [#allocation5], 2048
    $region17: #{tpu_custom_call.1} parent=1 // pred_fallthru
      _
    %3325 = vsyncpa [#allocation4], 1
    %3326 = vsyncpa [#allocation5], 1

</llo_original>
